<compile_context>
chip_gen: v7x
topology: tpu7x:2x2x1
jax: 0.10.0
libtpu: 0.0.40
codegen_flags: <defaults>
</compile_context>

<pallas_src>
import jax
import jax.numpy as jnp
from jax.experimental import pallas as pl
from jax.experimental.pallas import tpu as pltpu

# Logical / padded dims.
D_IN, D_IN_P = 28 * 28, 896      # 784 -> 896 (= 7 * 128)
H1,   H1_P   = 300, 384
H2,   H2_P   = 100, 128
ZPAD         = 128               # padded z_dim (lane-dense heads / outputs)


def _round_up(n, m):
    return ((n + m - 1) // m) * m


def encoder_kernel(x_ref, w1_ref, b1_ref, w2_ref, b2_ref, w3_ref, b3_ref,
                   ep_ref, out_ref):
    zp = ep_ref.shape[-1]

    # Linear(784 -> 300) + ReLU   (bf16 MXU inputs, f32 accumulation)
    h1 = jnp.dot(x_ref[...].astype(jnp.bfloat16), w1_ref[...],
                 preferred_element_type=jnp.float32) + b1_ref[...]
    h1 = jnp.maximum(h1, 0.0)

    # Linear(300 -> 100) + ReLU
    h2 = jnp.dot(h1.astype(jnp.bfloat16), w2_ref[...],
                 preferred_element_type=jnp.float32) + b2_ref[...]
    h2 = jnp.maximum(h2, 0.0)

    # Fused heads: one [128, 256] matmul -> (ave | log_dev)
    heads = jnp.dot(h2.astype(jnp.bfloat16), w3_ref[...],
                    preferred_element_type=jnp.float32) + b3_ref[...]
    ave = heads[:, :zp]
    log_dev = heads[:, zp:]

    # Reparameterization: z = ave + exp(log_dev / 2) * ep  (f32 VPU/EUP)
    z = ave + jnp.exp(log_dev * 0.5) * ep_ref[...]

    # One lane-dense output slab: (z | ave | log_dev)
    out_ref[...] = jnp.concatenate([z, ave, log_dev], axis=-1)


def encoder_forward(x, params, ep):
    """x: [B, 784] f32, ep: [B, z_dim] f32 (standard normal noise).

    Returns (z, ave, log_dev), each [B, z_dim] f32.
    """
    B, d_in = x.shape
    z_dim = params["z_dim"]
    zp = params["w3"].shape[1] // 2          # == ZPAD

    # Batch tiling: 256-row tiles at realistic batch sizes (fills the v6e/v7x
    # 256-wide MXU and is a 128-multiple for v5e); a single 8-aligned tile for
    # tiny batches.
    tb = 256 if B >= 256 else _round_up(B, 8)
    Bp = _round_up(B, tb)

    # Zero-pad inputs to the aligned shapes (padded weight rows/cols are zero,
    # so the valid outputs are unchanged).
    x_p = jnp.pad(x, ((0, Bp - B), (0, D_IN_P - d_in)))
    ep_p = jnp.pad(ep, ((0, Bp - B), (0, zp - ep.shape[1])))

    grid = (Bp // tb,)

    weight_flops = D_IN_P * H1_P + H1_P * H2_P + H2_P * 2 * zp
    cost = pl.CostEstimate(
        flops=2 * Bp * weight_flops,
        transcendentals=Bp * zp,
        bytes_accessed=(Bp * D_IN_P * 4 + Bp * zp * 4 + Bp * 3 * zp * 4
                        + weight_flops * 2
                        + (H1_P + H2_P + 2 * zp) * 4),
    )

    out = pl.pallas_call(
        encoder_kernel,
        out_shape=jax.ShapeDtypeStruct((Bp, 3 * zp), jnp.float32),
        grid_spec=pltpu.PrefetchScalarGridSpec(
            num_scalar_prefetch=0,
            grid=grid,
            in_specs=[
                pl.BlockSpec((tb, D_IN_P), lambda i: (i, 0)),       # x tile
                pl.BlockSpec((D_IN_P, H1_P), lambda i: (0, 0)),     # w1 (resident)
                pl.BlockSpec((1, H1_P), lambda i: (0, 0)),          # b1
                pl.BlockSpec((H1_P, H2_P), lambda i: (0, 0)),       # w2
                pl.BlockSpec((1, H2_P), lambda i: (0, 0)),          # b2
                pl.BlockSpec((H2_P, 2 * zp), lambda i: (0, 0)),     # fused head w
                pl.BlockSpec((1, 2 * zp), lambda i: (0, 0)),        # fused head b
                pl.BlockSpec((tb, zp), lambda i: (i, 0)),           # ep tile
            ],
            out_specs=pl.BlockSpec((tb, 3 * zp), lambda i: (i, 0)),
        ),
        compiler_params=pltpu.CompilerParams(
            dimension_semantics=("parallel",),
        ),
        cost_estimate=cost,
    )(x_p, params["w1"], params["b1"], params["w2"], params["b2"],
      params["w3"], params["b3"], ep_p)

    z = out[:B, :z_dim]
    ave = out[:B, zp:zp + z_dim]
    log_dev = out[:B, 2 * zp:2 * zp + z_dim]
    return z, ave, log_dev


def init_params(key, z_dim):
    """PyTorch-default-style Linear init (uniform(-1/sqrt(fan_in), +)), stored
    (in, out), zero-padded to aligned shapes, weights in bf16 / biases in f32.
    The two head layers are fused into a single [H2_P, 2*ZPAD] weight."""
    assert z_dim <= ZPAD

    def linear(k, fan_in, fan_out, fan_in_p, fan_out_p):
        kw, kb = jax.random.split(k)
        bound = 1.0 / jnp.sqrt(fan_in)
        w = jax.random.uniform(kw, (fan_in, fan_out), jnp.float32, -bound, bound)
        b = jax.random.uniform(kb, (1, fan_out), jnp.float32, -bound, bound)
        w_p = jnp.zeros((fan_in_p, fan_out_p), jnp.bfloat16)
        w_p = w_p.at[:fan_in, :fan_out].set(w.astype(jnp.bfloat16))
        b_p = jnp.zeros((1, fan_out_p), jnp.float32).at[:, :fan_out].set(b)
        return w_p, b_p

    k1, k2, k3, k4 = jax.random.split(key, 4)
    w1, b1 = linear(k1, D_IN, H1, D_IN_P, H1_P)
    w2, b2 = linear(k2, H1, H2, H1_P, H2_P)
    wa, ba = linear(k3, H2, z_dim, H2_P, ZPAD)
    wd, bd = linear(k4, H2, z_dim, H2_P, ZPAD)
    w3 = jnp.concatenate([wa, wd], axis=1)     # [H2_P, 2*ZPAD]
    b3 = jnp.concatenate([ba, bd], axis=1)     # [1, 2*ZPAD]
    return dict(w1=w1, b1=b1, w2=w2, b2=b2, w3=w3, b3=b3, z_dim=z_dim)


if __name__ == "__main__":
    key = jax.random.PRNGKey(0)
    k_params, k_x, k_ep = jax.random.split(key, 3)

    batch = 8
    z_dim = 16

    params = init_params(k_params, z_dim)
    x = jax.random.normal(k_x, (batch, 28 * 28), jnp.float32)
    # TODO(synk): torch.randn_like(ave) noise is generated host-side and passed
    # in; could use pltpu.prng_seed / stateful_normal in-kernel instead.
    ep = jax.random.normal(k_ep, (batch, z_dim), jnp.float32)

    z, ave, log_dev = encoder_forward(x, params, ep)
    jax.block_until_ready((z, ave, log_dev))

    # Pure-JAX reference using the same bf16-weight / f32-accumulate scheme.
    def mm(a, w):
        return jnp.dot(a.astype(jnp.bfloat16), w,
                       preferred_element_type=jnp.float32)

    w1 = params["w1"][:D_IN, :H1]
    b1 = params["b1"][:, :H1]
    w2 = params["w2"][:H1, :H2]
    b2 = params["b2"][:, :H2]
    wa = params["w3"][:H2, :z_dim]
    ba = params["b3"][:, :z_dim]
    wd = params["w3"][:H2, ZPAD:ZPAD + z_dim]
    bd = params["b3"][:, ZPAD:ZPAD + z_dim]

    h1 = jnp.maximum(mm(x, w1) + b1, 0.0)
    h2 = jnp.maximum(mm(h1, w2) + b2, 0.0)
    ave_ref = mm(h2, wa) + ba
    logdev_ref = mm(h2, wd) + bd
    z_ref = ave_ref + jnp.exp(logdev_ref * 0.5) * ep

    assert jnp.allclose(ave, ave_ref, atol=5e-3, rtol=5e-3)
    assert jnp.allclose(log_dev, logdev_ref, atol=5e-3, rtol=5e-3)
    assert jnp.allclose(z, z_ref, atol=5e-3, rtol=5e-3)

    print("KERNEL_OK")
</pallas_src>

<mosaic_0001>
module attributes {stable_mosaic.version = 11 : i64} {
  func.func @encoder_kernel(%arg0: i32, %arg1: memref<8x896xf32, #tpu.memory_space<vmem>>, %arg2: memref<896x384xbf16, #tpu.memory_space<vmem>>, %arg3: memref<1x384xf32, #tpu.memory_space<vmem>>, %arg4: memref<384x128xbf16, #tpu.memory_space<vmem>>, %arg5: memref<1x128xf32, #tpu.memory_space<vmem>>, %arg6: memref<128x256xbf16, #tpu.memory_space<vmem>>, %arg7: memref<1x256xf32, #tpu.memory_space<vmem>>, %arg8: memref<8x128xf32, #tpu.memory_space<vmem>>, %arg9: memref<8x384xf32, #tpu.memory_space<vmem>>) attributes {dimension_semantics = [#tpu.dimension_semantics<parallel>], iteration_bounds = array<i64: 1>, scalar_prefetch = 0 : i64, scratch_operands = 0 : i64, tpu.core_type = #tpu.core_type<tc>, window_params = [{transform_indices = @transform_0, window_bounds = array<i64: 8, 896>}, {pipeline_mode = #tpu.pipeline_mode<synchronous>, transform_indices = @transform_1, window_bounds = array<i64: 896, 384>}, {pipeline_mode = #tpu.pipeline_mode<synchronous>, transform_indices = @transform_2, window_bounds = array<i64: 1, 384>}, {pipeline_mode = #tpu.pipeline_mode<synchronous>, transform_indices = @transform_3, window_bounds = array<i64: 384, 128>}, {pipeline_mode = #tpu.pipeline_mode<synchronous>, transform_indices = @transform_4, window_bounds = array<i64: 1, 128>}, {pipeline_mode = #tpu.pipeline_mode<synchronous>, transform_indices = @transform_5, window_bounds = array<i64: 128, 256>}, {pipeline_mode = #tpu.pipeline_mode<synchronous>, transform_indices = @transform_6, window_bounds = array<i64: 1, 256>}, {transform_indices = @transform_7, window_bounds = array<i64: 8, 128>}, {transform_indices = @transform_8, window_bounds = array<i64: 8, 384>}]} {
    %c0 = arith.constant 0 : index
    %c0_0 = arith.constant 0 : index
    %0 = vector.load %arg1[%c0, %c0_0] : memref<8x896xf32, #tpu.memory_space<vmem>>, vector<8x896xf32>
    %1 = arith.truncf %0 : vector<8x896xf32> to vector<8x896xbf16>
    %c0_1 = arith.constant 0 : index
    %c0_2 = arith.constant 0 : index
    %2 = vector.load %arg2[%c0_1, %c0_2] : memref<896x384xbf16, #tpu.memory_space<vmem>>, vector<896x384xbf16>
    %cst = arith.constant dense<0.000000e+00> : vector<8x384xf32>
    %3 = tpu.matmul %1, %2, %cst {dimension_numbers = #tpu.dot_dimension_numbers<[1], [0], [0], [1], [0, 0, 1, 1], [], []>} : vector<8x896xbf16>, vector<896x384xbf16>, vector<8x384xf32> -> vector<8x384xf32>
    %c0_3 = arith.constant 0 : index
    %c0_4 = arith.constant 0 : index
    %4 = vector.load %arg3[%c0_3, %c0_4] : memref<1x384xf32, #tpu.memory_space<vmem>>, vector<1x384xf32>
    %5 = vector.broadcast %4 : vector<1x384xf32> to vector<8x384xf32>
    %6 = arith.addf %3, %5 : vector<8x384xf32>
    %cst_5 = arith.constant 0.000000e+00 : f32
    %7 = vector.broadcast %cst_5 : f32 to vector<8x384xf32>
    %8 = arith.maximumf %6, %7 : vector<8x384xf32>
    %9 = arith.truncf %8 : vector<8x384xf32> to vector<8x384xbf16>
    %c0_6 = arith.constant 0 : index
    %c0_7 = arith.constant 0 : index
    %10 = vector.load %arg4[%c0_6, %c0_7] : memref<384x128xbf16, #tpu.memory_space<vmem>>, vector<384x128xbf16>
    %cst_8 = arith.constant dense<0.000000e+00> : vector<8x128xf32>
    %11 = tpu.matmul %9, %10, %cst_8 {dimension_numbers = #tpu.dot_dimension_numbers<[1], [0], [0], [1], [0, 0, 1, 1], [], []>} : vector<8x384xbf16>, vector<384x128xbf16>, vector<8x128xf32> -> vector<8x128xf32>
    %c0_9 = arith.constant 0 : index
    %c0_10 = arith.constant 0 : index
    %12 = vector.load %arg5[%c0_9, %c0_10] : memref<1x128xf32, #tpu.memory_space<vmem>>, vector<1x128xf32>
    %13 = vector.broadcast %12 : vector<1x128xf32> to vector<8x128xf32>
    %14 = arith.addf %11, %13 : vector<8x128xf32>
    %cst_11 = arith.constant 0.000000e+00 : f32
    %15 = vector.broadcast %cst_11 : f32 to vector<8x128xf32>
    %16 = arith.maximumf %14, %15 : vector<8x128xf32>
    %17 = arith.truncf %16 : vector<8x128xf32> to vector<8x128xbf16>
    %c0_12 = arith.constant 0 : index
    %c0_13 = arith.constant 0 : index
    %18 = vector.load %arg6[%c0_12, %c0_13] : memref<128x256xbf16, #tpu.memory_space<vmem>>, vector<128x256xbf16>
    %cst_14 = arith.constant dense<0.000000e+00> : vector<8x256xf32>
    %19 = tpu.matmul %17, %18, %cst_14 {dimension_numbers = #tpu.dot_dimension_numbers<[1], [0], [0], [1], [0, 0, 1, 1], [], []>} : vector<8x128xbf16>, vector<128x256xbf16>, vector<8x256xf32> -> vector<8x256xf32>
    %c0_15 = arith.constant 0 : index
    %c0_16 = arith.constant 0 : index
    %20 = vector.load %arg7[%c0_15, %c0_16] : memref<1x256xf32, #tpu.memory_space<vmem>>, vector<1x256xf32>
    %21 = vector.broadcast %20 : vector<1x256xf32> to vector<8x256xf32>
    %22 = arith.addf %19, %21 : vector<8x256xf32>
    %23 = vector.extract_strided_slice %22 {offsets = [0, 0], sizes = [8, 128], strides = [1, 1]} : vector<8x256xf32> to vector<8x128xf32>
    %24 = vector.extract_strided_slice %22 {offsets = [0, 128], sizes = [8, 128], strides = [1, 1]} : vector<8x256xf32> to vector<8x128xf32>
    %cst_17 = arith.constant 5.000000e-01 : f32
    %25 = vector.broadcast %cst_17 : f32 to vector<8x128xf32>
    %26 = arith.mulf %24, %25 : vector<8x128xf32>
    %27 = math.exp %26 : vector<8x128xf32>
    %c0_18 = arith.constant 0 : index
    %c0_19 = arith.constant 0 : index
    %28 = vector.load %arg8[%c0_18, %c0_19] : memref<8x128xf32, #tpu.memory_space<vmem>>, vector<8x128xf32>
    %29 = arith.mulf %27, %28 : vector<8x128xf32>
    %30 = arith.addf %23, %29 : vector<8x128xf32>
    %31 = tpu.concatenate %30, %23, %24 in 1 : vector<8x128xf32>, vector<8x128xf32>, vector<8x128xf32> -> vector<8x384xf32>
    %c0_20 = arith.constant 0 : index
    %c0_21 = arith.constant 0 : index
    %32 = vector.load %arg9[%c0_20, %c0_21] : memref<8x384xf32, #tpu.memory_space<vmem>>, vector<8x384xf32>
    tpu.vector_store %arg9[%c0_20, %c0_21], %31 {strides = array<i32>} : memref<8x384xf32, #tpu.memory_space<vmem>>, vector<8x384xf32>,
    return
  }
  func.func @transform_0(%arg0: i32) -> (i32, i32) {
    %c0_i32 = arith.constant 0 : i32
    %c0_i32_0 = arith.constant 0 : i32
    return %arg0, %c0_i32 : i32, i32
  }
  func.func @transform_1(%arg0: i32) -> (i32, i32) {
    %c0_i32 = arith.constant 0 : i32
    %c0_i32_0 = arith.constant 0 : i32
    %c0_i32_1 = arith.constant 0 : i32
    return %c0_i32, %c0_i32_0 : i32, i32
  }
  func.func @transform_2(%arg0: i32) -> (i32, i32) {
    %c0_i32 = arith.constant 0 : i32
    %c0_i32_0 = arith.constant 0 : i32
    %c0_i32_1 = arith.constant 0 : i32
    return %c0_i32, %c0_i32_0 : i32, i32
  }
  func.func @transform_3(%arg0: i32) -> (i32, i32) {
    %c0_i32 = arith.constant 0 : i32
    %c0_i32_0 = arith.constant 0 : i32
    %c0_i32_1 = arith.constant 0 : i32
    return %c0_i32, %c0_i32_0 : i32, i32
  }
  func.func @transform_4(%arg0: i32) -> (i32, i32) {
    %c0_i32 = arith.constant 0 : i32
    %c0_i32_0 = arith.constant 0 : i32
    %c0_i32_1 = arith.constant 0 : i32
    return %c0_i32, %c0_i32_0 : i32, i32
  }
  func.func @transform_5(%arg0: i32) -> (i32, i32) {
    %c0_i32 = arith.constant 0 : i32
    %c0_i32_0 = arith.constant 0 : i32
    %c0_i32_1 = arith.constant 0 : i32
    return %c0_i32, %c0_i32_0 : i32, i32
  }
  func.func @transform_6(%arg0: i32) -> (i32, i32) {
    %c0_i32 = arith.constant 0 : i32
    %c0_i32_0 = arith.constant 0 : i32
    %c0_i32_1 = arith.constant 0 : i32
    return %c0_i32, %c0_i32_0 : i32, i32
  }
  func.func @transform_7(%arg0: i32) -> (i32, i32) {
    %c0_i32 = arith.constant 0 : i32
    %c0_i32_0 = arith.constant 0 : i32
    return %arg0, %c0_i32 : i32, i32
  }
  func.func @transform_8(%arg0: i32) -> (i32, i32) {
    %c0_i32 = arith.constant 0 : i32
    %c0_i32_0 = arith.constant 0 : i32
    return %arg0, %c0_i32 : i32, i32
  }
}

</mosaic_0001>

<llo_original>
// kernel: tpu_custom_call.1
$region0: #{tpu_custom_call.1}
  #allocation0 [shape = 'u32[]', space=smem, size = 0x4, offset = 0x4, fixed_abs, tag = 'smem constant byte address 0x4 - core index']
  #allocation1 [shape = 'u32[144,128]{1,0:T(1,128)}', space=vmem, size = 0x12000, scoped, tag = 'internal scratch']
  %s0 = inlined_call_operand.hbm [shape: f32[8,896], index: 0, kind: input, shape index: {}]
  %s1 = inlined_call_operand.hbm [shape: bf16[896,384], index: 1, kind: input, shape index: {}]
  %s2 = inlined_call_operand.vmem [shape: f32[1,384], index: 2, kind: input, shape index: {}]
  %s3 = inlined_call_operand.hbm [shape: bf16[384,128], index: 3, kind: input, shape index: {}]
  %s4 = inlined_call_operand.vmem [shape: f32[1,128], index: 4, kind: input, shape index: {}]
  %s5 = inlined_call_operand.hbm [shape: bf16[128,256], index: 5, kind: input, shape index: {}]
  %s6 = inlined_call_operand.vmem [shape: f32[1,256], index: 6, kind: input, shape index: {}]
  %s7 = inlined_call_operand.vmem [shape: f32[8,128], index: 7, kind: input, shape index: {}]
  %s8 = inlined_call_operand.hbm [shape: f32[8,384], index: 8, kind: output, shape index: {}]
  %s9 = sld [smem:[#allocation0]]
  $region58: #{tpu_custom_call.1} parent=0
    _
  %s11 = ssub.s32 1, %s9
  %s12 = scalar_select 0, %s11, %s9
  $region1: #{tpu_custom_call.1} parent=0
    #allocation2 [shape = 'u8[28672]{0}', space=vmem, size = 0x7000, scoped, tag = 'input window, operand 0, single buffered']
    #allocation3 [shape = 's32[1]{0}', space=sflag, size = 0x4, scoped, tag = 'scoped memory for tpu_custom_call.1']
    #allocation4 [shape = 's32[1]{0}', space=sflag, size = 0x4, scoped, tag = 'scoped memory for tpu_custom_call.1']
    #allocation5 [shape = 'u8[688128]{0}', space=vmem, size = 0xa8000, scoped, tag = 'input window, operand 1, single buffered']
    #allocation6 [shape = 's32[1]{0}', space=sflag, size = 0x4, scoped, tag = 'scoped memory for tpu_custom_call.1']
    #allocation7 [shape = 'u8[98304]{0}', space=vmem, size = 0x18000, scoped, tag = 'input window, operand 3, single buffered']
    #allocation8 [shape = 'u8[65536]{0}', space=vmem, size = 0x10000, scoped, tag = 'input window, operand 5, single buffered']
    #allocation9 [shape = 's32[1]{0}', space=sflag, size = 0x4, scoped, tag = 'scoped memory for tpu_custom_call.1']
    #allocation10 [shape = 'u8[12288]{0}', space=vmem, size = 0x3000, scoped, tag = 'output window, operand 0, single buffered']
    %13 = vsyncpa [#allocation3], 0
    %14 = vsyncpa [#allocation6], 0
    %15 = vsyncpa [#allocation9], 0
    %16 = vsyncpa [#allocation4], 0
    // Predicated region
    $region2: #{tpu_custom_call.1} parent=1 // pred_check
      _
    $region3: #{tpu_custom_call.1} parent=1 // pred_check_branch
      %18 = sbr.rel (0) target = $region5
    $region4: #{tpu_custom_call.1} parent=1 // pred_region
      %s20 = ssub.s32 896, 896
      %21 = vsyncadd [#allocation3], %s20
      %s23 = sshll.u32 [#allocation2], 4
      %s24 = int_to_ptr.vmem [resolvable:$true] %s23
      %26 = dma.hbm_to_vmem [thread:$0]  %s0, 896, %s24, [#allocation3]
    $region5: #{tpu_custom_call.1} parent=1 // pred_fallthru
      _
    // Predicated region
    $region6: #{tpu_custom_call.1} parent=1 // pred_check
      _
    $region7: #{tpu_custom_call.1} parent=1 // pred_check_branch
      %28 = sbr.rel (0) target = $region9
    $region8: #{tpu_custom_call.1} parent=1 // pred_region
      %s30 = ssub.s32 21504, 21504
      %31 = vsyncadd [#allocation6], %s30
      %s32 = sshll.u32 [#allocation5], 4
      %s33 = int_to_ptr.vmem [resolvable:$true] %s32
      %38 = dma.hbm_to_vmem [thread:$0]  %s1, 21504, %s33, [#allocation6], 192, 192, 12
    $region9: #{tpu_custom_call.1} parent=1 // pred_fallthru
      _
    // Predicated region
    $region10: #{tpu_custom_call.1} parent=1 // pred_check
      _
    $region11: #{tpu_custom_call.1} parent=1 // pred_check_branch
      %40 = sbr.rel (0) target = $region13
    $region12: #{tpu_custom_call.1} parent=1 // pred_region
      _
    $region13: #{tpu_custom_call.1} parent=1 // pred_fallthru
      _
    // Predicated region
    $region14: #{tpu_custom_call.1} parent=1 // pred_check
      _
    $region15: #{tpu_custom_call.1} parent=1 // pred_check_branch
      %42 = sbr.rel (0) target = $region17
    $region16: #{tpu_custom_call.1} parent=1 // pred_region
      %s44 = ssub.s32 3072, 3072
      %45 = vsyncadd [#allocation6], %s44
      %s46 = sshll.u32 [#allocation7], 4
      %s47 = int_to_ptr.vmem [resolvable:$true] %s46
      %52 = dma.hbm_to_vmem [thread:$0]  %s3, 3072, %s47, [#allocation6], 64, 64, 4
    $region17: #{tpu_custom_call.1} parent=1 // pred_fallthru
      _
    // Predicated region
    $region18: #{tpu_custom_call.1} parent=1 // pred_check
      _
    $region19: #{tpu_custom_call.1} parent=1 // pred_check_branch
      %54 = sbr.rel (0) target = $region21
    $region20: #{tpu_custom_call.1} parent=1 // pred_region
      _
    $region21: #{tpu_custom_call.1} parent=1 // pred_fallthru
      _
    // Predicated region
    $region22: #{tpu_custom_call.1} parent=1 // pred_check
      _
    $region23: #{tpu_custom_call.1} parent=1 // pred_check_branch
      %56 = sbr.rel (0) target = $region25
    $region24: #{tpu_custom_call.1} parent=1 // pred_region
      %s58 = ssub.s32 2048, 2048
      %59 = vsyncadd [#allocation9], %s58
      %s60 = sshll.u32 [#allocation8], 4
      %s61 = int_to_ptr.vmem [resolvable:$true] %s60
      %66 = dma.hbm_to_vmem [thread:$0]  %s5, 2048, %s61, [#allocation9], 128, 128, 8
    $region25: #{tpu_custom_call.1} parent=1 // pred_fallthru
      _
    // Predicated region
    $region26: #{tpu_custom_call.1} parent=1 // pred_check
      _
    $region27: #{tpu_custom_call.1} parent=1 // pred_check_branch
      %68 = sbr.rel (0) target = $region29
    $region28: #{tpu_custom_call.1} parent=1 // pred_region
      _
    $region29: #{tpu_custom_call.1} parent=1 // pred_fallthru
      _
    // Predicated region
    $region30: #{tpu_custom_call.1} parent=1 // pred_check
      _
    $region31: #{tpu_custom_call.1} parent=1 // pred_check_branch
      %70 = sbr.rel (0) target = $region33
    $region32: #{tpu_custom_call.1} parent=1 // pred_region
      _
    $region33: #{tpu_custom_call.1} parent=1 // pred_fallthru
      _
    // Predicated region
    $region34: #{tpu_custom_call.1} parent=1 // pred_check
      _
    $region35: #{tpu_custom_call.1} parent=1 // pred_check_branch
      %72 = sbr.rel (0) target = $region37
    $region36: #{tpu_custom_call.1} parent=1 // pred_region
      %73 = dma.done [#allocation3], 896
    $region37: #{tpu_custom_call.1} parent=1 // pred_fallthru
      _
    // Predicated region
    $region38: #{tpu_custom_call.1} parent=1 // pred_check
      _
    $region39: #{tpu_custom_call.1} parent=1 // pred_check_branch
      %75 = sbr.rel (0) target = $region41
    $region40: #{tpu_custom_call.1} parent=1 // pred_region
      %76 = dma.done [#allocation6], 21504
    $region41: #{tpu_custom_call.1} parent=1 // pred_fallthru
      _
    // Predicated region
    $region42: #{tpu_custom_call.1} parent=1 // pred_check
      _
    $region43: #{tpu_custom_call.1} parent=1 // pred_check_branch
      %78 = sbr.rel (0) target = $region45
    $region44: #{tpu_custom_call.1} parent=1 // pred_region
      %79 = dma.done [#allocation6], 3072
    $region45: #{tpu_custom_call.1} parent=1 // pred_fallthru
      _
    // Predicated region
    $region46: #{tpu_custom_call.1} parent=1 // pred_check
      _
    $region47: #{tpu_custom_call.1} parent=1 // pred_check_branch
      %81 = sbr.rel (0) target = $region49
    $region48: #{tpu_custom_call.1} parent=1 // pred_region
      %82 = dma.done [#allocation9], 2048
    $region49: #{tpu_custom_call.1} parent=1 // pred_fallthru
      _
    %v84 = vld [vmem:[#allocation2] sm:$0xff]
    %v85 = vld [vmem:[#allocation2 + $0x8] sm:$0xff]
    %v86 = vld [vmem:[#allocation2 + $0x10] sm:$0xff]
    %v87 = vld [vmem:[#allocation2 + $0x18] sm:$0xff]
    %v88 = vld [vmem:[#allocation2 + $0x20] sm:$0xff]
    %v89 = vld [vmem:[#allocation2 + $0x28] sm:$0xff]
    %v90 = vld [vmem:[#allocation2 + $0x30] sm:$0xff]
    %v91 = vpack.c.bf16 %v84, %v84
    %v92 = vpack.c.bf16 %v85, %v85
    %v93 = vpack.c.bf16 %v86, %v86
    %v94 = vpack.c.bf16 %v87, %v87
    %v95 = vpack.c.bf16 %v88, %v88
    %v96 = vpack.c.bf16 %v89, %v89
    %v97 = vpack.c.bf16 %v90, %v90
    %v98 = vld [vmem:[#allocation5] sm:$0xff]
    %v99 = vld [vmem:[#allocation5 + $0x8] sm:$0xf]
    %v100 = vld [vmem:[#allocation5 + $0xc] sm:$0xff]
    %v101 = vld [vmem:[#allocation5 + $0x14] sm:$0xf]
    %v102 = vld [vmem:[#allocation5 + $0x18] sm:$0xff]
    %v103 = vld [vmem:[#allocation5 + $0x20] sm:$0xf]
    %v104 = vld [vmem:[#allocation5 + $0x24] sm:$0xff]
    %v105 = vld [vmem:[#allocation5 + $0x2c] sm:$0xf]
    %v106 = vld [vmem:[#allocation5 + $0x30] sm:$0xff]
    %v107 = vld [vmem:[#allocation5 + $0x38] sm:$0xf]
    %v108 = vld [vmem:[#allocation5 + $0x3c] sm:$0xff]
    %v109 = vld [vmem:[#allocation5 + $0x44] sm:$0xf]
    %v110 = vld [vmem:[#allocation5 + $0x48] sm:$0xff]
    %v111 = vld [vmem:[#allocation5 + $0x50] sm:$0xf]
    %v112 = vld [vmem:[#allocation5 + $0x54] sm:$0xff]
    %v113 = vld [vmem:[#allocation5 + $0x5c] sm:$0xf]
    %v114 = vld [vmem:[#allocation5 + $0x60] sm:$0xff]
    %v115 = vld [vmem:[#allocation5 + $0x68] sm:$0xf]
    %v116 = vld [vmem:[#allocation5 + $0x6c] sm:$0xff]
    %v117 = vld [vmem:[#allocation5 + $0x74] sm:$0xf]
    %v118 = vld [vmem:[#allocation5 + $0x78] sm:$0xff]
    %v119 = vld [vmem:[#allocation5 + $0x80] sm:$0xf]
    %v120 = vld [vmem:[#allocation5 + $0x84] sm:$0xff]
    %v121 = vld [vmem:[#allocation5 + $0x8c] sm:$0xf]
    %v122 = vld [vmem:[#allocation5 + $0x90] sm:$0xff]
    %v123 = vld [vmem:[#allocation5 + $0x98] sm:$0xf]
    %v124 = vld [vmem:[#allocation5 + $0x9c] sm:$0xff]
    %v125 = vld [vmem:[#allocation5 + $0xa4] sm:$0xf]
    %v126 = vld [vmem:[#allocation5 + $0xa8] sm:$0xff]
    %v127 = vld [vmem:[#allocation5 + $0xb0] sm:$0xf]
    %v128 = vld [vmem:[#allocation5 + $0xb4] sm:$0xff]
    %v129 = vld [vmem:[#allocation5 + $0xbc] sm:$0xf]
    %v130 = vld [vmem:[#allocation5 + $0xc0] sm:$0xff]
    %v131 = vld [vmem:[#allocation5 + $0xc8] sm:$0xf]
    %v132 = vld [vmem:[#allocation5 + $0xcc] sm:$0xff]
    %v133 = vld [vmem:[#allocation5 + $0xd4] sm:$0xf]
    %v134 = vld [vmem:[#allocation5 + $0xd8] sm:$0xff]
    %v135 = vld [vmem:[#allocation5 + $0xe0] sm:$0xf]
    %v136 = vld [vmem:[#allocation5 + $0xe4] sm:$0xff]
    %v137 = vld [vmem:[#allocation5 + $0xec] sm:$0xf]
    %v138 = vld [vmem:[#allocation5 + $0xf0] sm:$0xff]
    %v139 = vld [vmem:[#allocation5 + $0xf8] sm:$0xf]
    %v140 = vld [vmem:[#allocation5 + $0xfc] sm:$0xff]
    %v141 = vld [vmem:[#allocation5 + $0x104] sm:$0xf]
    %v142 = vld [vmem:[#allocation5 + $0x108] sm:$0xff]
    %v143 = vld [vmem:[#allocation5 + $0x110] sm:$0xf]
    %v144 = vld [vmem:[#allocation5 + $0x114] sm:$0xff]
    %v145 = vld [vmem:[#allocation5 + $0x11c] sm:$0xf]
    %v146 = vld [vmem:[#allocation5 + $0x120] sm:$0xff]
    %v147 = vld [vmem:[#allocation5 + $0x128] sm:$0xf]
    %v148 = vld [vmem:[#allocation5 + $0x12c] sm:$0xff]
    %v149 = vld [vmem:[#allocation5 + $0x134] sm:$0xf]
    %v150 = vld [vmem:[#allocation5 + $0x138] sm:$0xff]
    %v151 = vld [vmem:[#allocation5 + $0x140] sm:$0xf]
    %v152 = vld [vmem:[#allocation5 + $0x144] sm:$0xff]
    %v153 = vld [vmem:[#allocation5 + $0x14c] sm:$0xf]
    %v154 = vld [vmem:[#allocation5 + $0x150] sm:$0xff]
    %v155 = vld [vmem:[#allocation5 + $0x158] sm:$0xf]
    %v156 = vld [vmem:[#allocation5 + $0x15c] sm:$0xff]
    %v157 = vld [vmem:[#allocation5 + $0x164] sm:$0xf]
    %v158 = vld [vmem:[#allocation5 + $0x168] sm:$0xff]
    %v159 = vld [vmem:[#allocation5 + $0x170] sm:$0xf]
    %v160 = vld [vmem:[#allocation5 + $0x174] sm:$0xff]
    %v161 = vld [vmem:[#allocation5 + $0x17c] sm:$0xf]
    %v162 = vld [vmem:[#allocation5 + $0x180] sm:$0xff]
    %v163 = vld [vmem:[#allocation5 + $0x188] sm:$0xf]
    %v164 = vld [vmem:[#allocation5 + $0x18c] sm:$0xff]
    %v165 = vld [vmem:[#allocation5 + $0x194] sm:$0xf]
    %v166 = vld [vmem:[#allocation5 + $0x198] sm:$0xff]
    %v167 = vld [vmem:[#allocation5 + $0x1a0] sm:$0xf]
    %v168 = vld [vmem:[#allocation5 + $0x1a4] sm:$0xff]
    %v169 = vld [vmem:[#allocation5 + $0x1ac] sm:$0xf]
    %v170 = vld [vmem:[#allocation5 + $0x1b0] sm:$0xff]
    %v171 = vld [vmem:[#allocation5 + $0x1b8] sm:$0xf]
    %v172 = vld [vmem:[#allocation5 + $0x1bc] sm:$0xff]
    %v173 = vld [vmem:[#allocation5 + $0x1c4] sm:$0xf]
    %v174 = vld [vmem:[#allocation5 + $0x1c8] sm:$0xff]
    %v175 = vld [vmem:[#allocation5 + $0x1d0] sm:$0xf]
    %v176 = vld [vmem:[#allocation5 + $0x1d4] sm:$0xff]
    %v177 = vld [vmem:[#allocation5 + $0x1dc] sm:$0xf]
    %v178 = vld [vmem:[#allocation5 + $0x1e0] sm:$0xff]
    %v179 = vld [vmem:[#allocation5 + $0x1e8] sm:$0xf]
    %v180 = vld [vmem:[#allocation5 + $0x1ec] sm:$0xff]
    %v181 = vld [vmem:[#allocation5 + $0x1f4] sm:$0xf]
    %v182 = vld [vmem:[#allocation5 + $0x1f8] sm:$0xff]
    %v183 = vld [vmem:[#allocation5 + $0x200] sm:$0xf]
    %v184 = vld [vmem:[#allocation5 + $0x204] sm:$0xff]
    %v185 = vld [vmem:[#allocation5 + $0x20c] sm:$0xf]
    %v186 = vld [vmem:[#allocation5 + $0x210] sm:$0xff]
    %v187 = vld [vmem:[#allocation5 + $0x218] sm:$0xf]
    %v188 = vld [vmem:[#allocation5 + $0x21c] sm:$0xff]
    %v189 = vld [vmem:[#allocation5 + $0x224] sm:$0xf]
    %v190 = vld [vmem:[#allocation5 + $0x228] sm:$0xff]
    %v191 = vld [vmem:[#allocation5 + $0x230] sm:$0xf]
    %v192 = vld [vmem:[#allocation5 + $0x234] sm:$0xff]
    %v193 = vld [vmem:[#allocation5 + $0x23c] sm:$0xf]
    %v194 = vld [vmem:[#allocation5 + $0x240] sm:$0xff]
    %v195 = vld [vmem:[#allocation5 + $0x248] sm:$0xf]
    %v196 = vld [vmem:[#allocation5 + $0x24c] sm:$0xff]
    %v197 = vld [vmem:[#allocation5 + $0x254] sm:$0xf]
    %v198 = vld [vmem:[#allocation5 + $0x258] sm:$0xff]
    %v199 = vld [vmem:[#allocation5 + $0x260] sm:$0xf]
    %v200 = vld [vmem:[#allocation5 + $0x264] sm:$0xff]
    %v201 = vld [vmem:[#allocation5 + $0x26c] sm:$0xf]
    %v202 = vld [vmem:[#allocation5 + $0x270] sm:$0xff]
    %v203 = vld [vmem:[#allocation5 + $0x278] sm:$0xf]
    %v204 = vld [vmem:[#allocation5 + $0x27c] sm:$0xff]
    %v205 = vld [vmem:[#allocation5 + $0x284] sm:$0xf]
    %v206 = vld [vmem:[#allocation5 + $0x288] sm:$0xff]
    %v207 = vld [vmem:[#allocation5 + $0x290] sm:$0xf]
    %v208 = vld [vmem:[#allocation5 + $0x294] sm:$0xff]
    %v209 = vld [vmem:[#allocation5 + $0x29c] sm:$0xf]
    %v210 = vld [vmem:[#allocation5 + $0x2a0] sm:$0xff]
    %v211 = vld [vmem:[#allocation5 + $0x2a8] sm:$0xf]
    %v212 = vld [vmem:[#allocation5 + $0x2ac] sm:$0xff]
    %v213 = vld [vmem:[#allocation5 + $0x2b4] sm:$0xf]
    %v214 = vld [vmem:[#allocation5 + $0x2b8] sm:$0xff]
    %v215 = vld [vmem:[#allocation5 + $0x2c0] sm:$0xf]
    %v216 = vld [vmem:[#allocation5 + $0x2c4] sm:$0xff]
    %v217 = vld [vmem:[#allocation5 + $0x2cc] sm:$0xf]
    %v218 = vld [vmem:[#allocation5 + $0x2d0] sm:$0xff]
    %v219 = vld [vmem:[#allocation5 + $0x2d8] sm:$0xf]
    %v220 = vld [vmem:[#allocation5 + $0x2dc] sm:$0xff]
    %v221 = vld [vmem:[#allocation5 + $0x2e4] sm:$0xf]
    %v222 = vld [vmem:[#allocation5 + $0x2e8] sm:$0xff]
    %v223 = vld [vmem:[#allocation5 + $0x2f0] sm:$0xf]
    %v224 = vld [vmem:[#allocation5 + $0x2f4] sm:$0xff]
    %v225 = vld [vmem:[#allocation5 + $0x2fc] sm:$0xf]
    %v226 = vld [vmem:[#allocation5 + $0x300] sm:$0xff]
    %v227 = vld [vmem:[#allocation5 + $0x308] sm:$0xf]
    %v228 = vld [vmem:[#allocation5 + $0x30c] sm:$0xff]
    %v229 = vld [vmem:[#allocation5 + $0x314] sm:$0xf]
    %v230 = vld [vmem:[#allocation5 + $0x318] sm:$0xff]
    %v231 = vld [vmem:[#allocation5 + $0x320] sm:$0xf]
    %v232 = vld [vmem:[#allocation5 + $0x324] sm:$0xff]
    %v233 = vld [vmem:[#allocation5 + $0x32c] sm:$0xf]
    %v234 = vld [vmem:[#allocation5 + $0x330] sm:$0xff]
    %v235 = vld [vmem:[#allocation5 + $0x338] sm:$0xf]
    %v236 = vld [vmem:[#allocation5 + $0x33c] sm:$0xff]
    %v237 = vld [vmem:[#allocation5 + $0x344] sm:$0xf]
    %v238 = vld [vmem:[#allocation5 + $0x348] sm:$0xff]
    %v239 = vld [vmem:[#allocation5 + $0x350] sm:$0xf]
    %v240 = vld [vmem:[#allocation5 + $0x354] sm:$0xff]
    %v241 = vld [vmem:[#allocation5 + $0x35c] sm:$0xf]
    %v242 = vld [vmem:[#allocation5 + $0x360] sm:$0xff]
    %v243 = vld [vmem:[#allocation5 + $0x368] sm:$0xf]
    %v244 = vld [vmem:[#allocation5 + $0x36c] sm:$0xff]
    %v245 = vld [vmem:[#allocation5 + $0x374] sm:$0xf]
    %v246 = vld [vmem:[#allocation5 + $0x378] sm:$0xff]
    %v247 = vld [vmem:[#allocation5 + $0x380] sm:$0xf]
    %v248 = vld [vmem:[#allocation5 + $0x384] sm:$0xff]
    %v249 = vld [vmem:[#allocation5 + $0x38c] sm:$0xf]
    %v250 = vld [vmem:[#allocation5 + $0x390] sm:$0xff]
    %v251 = vld [vmem:[#allocation5 + $0x398] sm:$0xf]
    %v252 = vld [vmem:[#allocation5 + $0x39c] sm:$0xff]
    %v253 = vld [vmem:[#allocation5 + $0x3a4] sm:$0xf]
    %v254 = vld [vmem:[#allocation5 + $0x3a8] sm:$0xff]
    %v255 = vld [vmem:[#allocation5 + $0x3b0] sm:$0xf]
    %v256 = vld [vmem:[#allocation5 + $0x3b4] sm:$0xff]
    %v257 = vld [vmem:[#allocation5 + $0x3bc] sm:$0xf]
    %v258 = vld [vmem:[#allocation5 + $0x3c0] sm:$0xff]
    %v259 = vld [vmem:[#allocation5 + $0x3c8] sm:$0xf]
    %v260 = vld [vmem:[#allocation5 + $0x3cc] sm:$0xff]
    %v261 = vld [vmem:[#allocation5 + $0x3d4] sm:$0xf]
    %v262 = vld [vmem:[#allocation5 + $0x3d8] sm:$0xff]
    %v263 = vld [vmem:[#allocation5 + $0x3e0] sm:$0xf]
    %v264 = vld [vmem:[#allocation5 + $0x3e4] sm:$0xff]
    %v265 = vld [vmem:[#allocation5 + $0x3ec] sm:$0xf]
    %v266 = vld [vmem:[#allocation5 + $0x3f0] sm:$0xff]
    %v267 = vld [vmem:[#allocation5 + $0x3f8] sm:$0xf]
    %v268 = vld [vmem:[#allocation5 + $0x3fc] sm:$0xff]
    %v269 = vld [vmem:[#allocation5 + $0x404] sm:$0xf]
    %v270 = vld [vmem:[#allocation5 + $0x408] sm:$0xff]
    %v271 = vld [vmem:[#allocation5 + $0x410] sm:$0xf]
    %v272 = vld [vmem:[#allocation5 + $0x414] sm:$0xff]
    %v273 = vld [vmem:[#allocation5 + $0x41c] sm:$0xf]
    %v274 = vld [vmem:[#allocation5 + $0x420] sm:$0xff]
    %v275 = vld [vmem:[#allocation5 + $0x428] sm:$0xf]
    %v276 = vld [vmem:[#allocation5 + $0x42c] sm:$0xff]
    %v277 = vld [vmem:[#allocation5 + $0x434] sm:$0xf]
    %v278 = vld [vmem:[#allocation5 + $0x438] sm:$0xff]
    %v279 = vld [vmem:[#allocation5 + $0x440] sm:$0xf]
    %v280 = vld [vmem:[#allocation5 + $0x444] sm:$0xff]
    %v281 = vld [vmem:[#allocation5 + $0x44c] sm:$0xf]
    %v282 = vld [vmem:[#allocation5 + $0x450] sm:$0xff]
    %v283 = vld [vmem:[#allocation5 + $0x458] sm:$0xf]
    %v284 = vld [vmem:[#allocation5 + $0x45c] sm:$0xff]
    %v285 = vld [vmem:[#allocation5 + $0x464] sm:$0xf]
    %v286 = vld [vmem:[#allocation5 + $0x468] sm:$0xff]
    %v287 = vld [vmem:[#allocation5 + $0x470] sm:$0xf]
    %v288 = vld [vmem:[#allocation5 + $0x474] sm:$0xff]
    %v289 = vld [vmem:[#allocation5 + $0x47c] sm:$0xf]
    %v290 = vld [vmem:[#allocation5 + $0x480] sm:$0xff]
    %v291 = vld [vmem:[#allocation5 + $0x488] sm:$0xf]
    %v292 = vld [vmem:[#allocation5 + $0x48c] sm:$0xff]
    %v293 = vld [vmem:[#allocation5 + $0x494] sm:$0xf]
    %v294 = vld [vmem:[#allocation5 + $0x498] sm:$0xff]
    %v295 = vld [vmem:[#allocation5 + $0x4a0] sm:$0xf]
    %v296 = vld [vmem:[#allocation5 + $0x4a4] sm:$0xff]
    %v297 = vld [vmem:[#allocation5 + $0x4ac] sm:$0xf]
    %v298 = vld [vmem:[#allocation5 + $0x4b0] sm:$0xff]
    %v299 = vld [vmem:[#allocation5 + $0x4b8] sm:$0xf]
    %v300 = vld [vmem:[#allocation5 + $0x4bc] sm:$0xff]
    %v301 = vld [vmem:[#allocation5 + $0x4c4] sm:$0xf]
    %v302 = vld [vmem:[#allocation5 + $0x4c8] sm:$0xff]
    %v303 = vld [vmem:[#allocation5 + $0x4d0] sm:$0xf]
    %v304 = vld [vmem:[#allocation5 + $0x4d4] sm:$0xff]
    %v305 = vld [vmem:[#allocation5 + $0x4dc] sm:$0xf]
    %v306 = vld [vmem:[#allocation5 + $0x4e0] sm:$0xff]
    %v307 = vld [vmem:[#allocation5 + $0x4e8] sm:$0xf]
    %v308 = vld [vmem:[#allocation5 + $0x4ec] sm:$0xff]
    %v309 = vld [vmem:[#allocation5 + $0x4f4] sm:$0xf]
    %v310 = vld [vmem:[#allocation5 + $0x4f8] sm:$0xff]
    %v311 = vld [vmem:[#allocation5 + $0x500] sm:$0xf]
    %v312 = vld [vmem:[#allocation5 + $0x504] sm:$0xff]
    %v313 = vld [vmem:[#allocation5 + $0x50c] sm:$0xf]
    %v314 = vld [vmem:[#allocation5 + $0x510] sm:$0xff]
    %v315 = vld [vmem:[#allocation5 + $0x518] sm:$0xf]
    %v316 = vld [vmem:[#allocation5 + $0x51c] sm:$0xff]
    %v317 = vld [vmem:[#allocation5 + $0x524] sm:$0xf]
    %v318 = vld [vmem:[#allocation5 + $0x528] sm:$0xff]
    %v319 = vld [vmem:[#allocation5 + $0x530] sm:$0xf]
    %v320 = vld [vmem:[#allocation5 + $0x534] sm:$0xff]
    %v321 = vld [vmem:[#allocation5 + $0x53c] sm:$0xf]
    %v322 = vld [vmem:[%s2] sm:$0x7]
    %v324 = vlaneseq
    %v325 = vshrl.u32 %v324, 7
    %v326 = vsub.s32 0, %v325
    %v327 = vrot.slane %v322, %v326
    %v328 = vlaneseq
    %v329 = vshrl.u32 %v328, 7
    %v330 = vsub.s32 1, %v329
    %v331 = vrot.slane %v322, %v330
    %v332 = vlaneseq
    %v333 = vshrl.u32 %v332, 7
    %v334 = vsub.s32 2, %v333
    %v335 = vrot.slane %v322, %v334
    %v563 = vunpack.c.l.b16 %v98
    %v564 = vunpack.c.h.b16 %v98
    %v565 = vunpack.c.l.b16 %v99
    %v566 = vunpack.c.l.b16 %v100
    %v567 = vunpack.c.h.b16 %v100
    %v568 = vunpack.c.l.b16 %v101
    %v569 = vunpack.c.l.b16 %v102
    %v570 = vunpack.c.h.b16 %v102
    %v571 = vunpack.c.l.b16 %v103
    %v572 = vunpack.c.l.b16 %v104
    %v573 = vunpack.c.h.b16 %v104
    %v574 = vunpack.c.l.b16 %v105
    %v575 = vunpack.c.l.b16 %v106
    %v576 = vunpack.c.h.b16 %v106
    %v577 = vunpack.c.l.b16 %v107
    %v578 = vunpack.c.l.b16 %v108
    %v579 = vunpack.c.h.b16 %v108
    %v580 = vunpack.c.l.b16 %v109
    %v581 = vunpack.c.l.b16 %v110
    %v582 = vunpack.c.h.b16 %v110
    %v583 = vunpack.c.l.b16 %v111
    %v584 = vunpack.c.l.b16 %v112
    %v585 = vunpack.c.h.b16 %v112
    %v586 = vunpack.c.l.b16 %v113
    %v587 = vunpack.c.l.b16 %v114
    %v588 = vunpack.c.h.b16 %v114
    %v589 = vunpack.c.l.b16 %v115
    %v590 = vunpack.c.l.b16 %v116
    %v591 = vunpack.c.h.b16 %v116
    %v592 = vunpack.c.l.b16 %v117
    %v593 = vunpack.c.l.b16 %v118
    %v594 = vunpack.c.h.b16 %v118
    %v595 = vunpack.c.l.b16 %v119
    %v596 = vunpack.c.l.b16 %v120
    %v597 = vunpack.c.h.b16 %v120
    %v598 = vunpack.c.l.b16 %v121
    %v599 = vunpack.c.l.b16 %v122
    %v600 = vunpack.c.h.b16 %v122
    %v601 = vunpack.c.l.b16 %v123
    %v602 = vunpack.c.l.b16 %v124
    %v603 = vunpack.c.h.b16 %v124
    %v604 = vunpack.c.l.b16 %v125
    %v605 = vunpack.c.l.b16 %v126
    %v606 = vunpack.c.h.b16 %v126
    %v607 = vunpack.c.l.b16 %v127
    %v608 = vunpack.c.l.b16 %v128
    %v609 = vunpack.c.h.b16 %v128
    %v610 = vunpack.c.l.b16 %v129
    %v611 = vunpack.c.l.b16 %v130
    %v612 = vunpack.c.h.b16 %v130
    %v613 = vunpack.c.l.b16 %v131
    %v614 = vunpack.c.l.b16 %v132
    %v615 = vunpack.c.h.b16 %v132
    %v616 = vunpack.c.l.b16 %v133
    %v617 = vunpack.c.l.b16 %v134
    %v618 = vunpack.c.h.b16 %v134
    %v619 = vunpack.c.l.b16 %v135
    %v620 = vunpack.c.l.b16 %v136
    %v621 = vunpack.c.h.b16 %v136
    %v622 = vunpack.c.l.b16 %v137
    %v623 = vunpack.c.l.b16 %v138
    %v624 = vunpack.c.h.b16 %v138
    %v625 = vunpack.c.l.b16 %v139
    %v626 = vunpack.c.l.b16 %v140
    %v627 = vunpack.c.h.b16 %v140
    %v628 = vunpack.c.l.b16 %v141
    %v629 = vunpack.c.l.b16 %v142
    %v630 = vunpack.c.h.b16 %v142
    %v631 = vunpack.c.l.b16 %v143
    %v632 = vunpack.c.l.b16 %v144
    %v633 = vunpack.c.h.b16 %v144
    %v634 = vunpack.c.l.b16 %v145
    %v635 = vunpack.c.l.b16 %v146
    %v636 = vunpack.c.h.b16 %v146
    %v637 = vunpack.c.l.b16 %v147
    %v638 = vunpack.c.l.b16 %v148
    %v639 = vunpack.c.h.b16 %v148
    %v640 = vunpack.c.l.b16 %v149
    %v641 = vunpack.c.l.b16 %v150
    %v642 = vunpack.c.h.b16 %v150
    %v643 = vunpack.c.l.b16 %v151
    %v644 = vunpack.c.l.b16 %v152
    %v645 = vunpack.c.h.b16 %v152
    %v646 = vunpack.c.l.b16 %v153
    %v647 = vunpack.c.l.b16 %v154
    %v648 = vunpack.c.h.b16 %v154
    %v649 = vunpack.c.l.b16 %v155
    %v650 = vunpack.c.l.b16 %v156
    %v651 = vunpack.c.h.b16 %v156
    %v652 = vunpack.c.l.b16 %v157
    %v653 = vunpack.c.l.b16 %v158
    %v654 = vunpack.c.h.b16 %v158
    %v655 = vunpack.c.l.b16 %v159
    %v656 = vunpack.c.l.b16 %v160
    %v657 = vunpack.c.h.b16 %v160
    %v658 = vunpack.c.l.b16 %v161
    %v659 = vunpack.c.l.b16 %v162
    %v660 = vunpack.c.h.b16 %v162
    %v661 = vunpack.c.l.b16 %v163
    %v662 = vunpack.c.l.b16 %v164
    %v663 = vunpack.c.h.b16 %v164
    %v664 = vunpack.c.l.b16 %v165
    %v665 = vunpack.c.l.b16 %v166
    %v666 = vunpack.c.h.b16 %v166
    %v667 = vunpack.c.l.b16 %v167
    %v668 = vunpack.c.l.b16 %v168
    %v669 = vunpack.c.h.b16 %v168
    %v670 = vunpack.c.l.b16 %v169
    %v671 = vunpack.c.l.b16 %v170
    %v672 = vunpack.c.h.b16 %v170
    %v673 = vunpack.c.l.b16 %v171
    %v674 = vunpack.c.l.b16 %v172
    %v675 = vunpack.c.h.b16 %v172
    %v676 = vunpack.c.l.b16 %v173
    %v677 = vunpack.c.l.b16 %v174
    %v678 = vunpack.c.h.b16 %v174
    %v679 = vunpack.c.l.b16 %v175
    %v680 = vunpack.c.l.b16 %v176
    %v681 = vunpack.c.h.b16 %v176
    %v682 = vunpack.c.l.b16 %v177
    %v683 = vunpack.c.l.b16 %v178
    %v684 = vunpack.c.h.b16 %v178
    %v685 = vunpack.c.l.b16 %v179
    %v686 = vunpack.c.l.b16 %v180
    %v687 = vunpack.c.h.b16 %v180
    %v688 = vunpack.c.l.b16 %v181
    %v689 = vunpack.c.l.b16 %v182
    %v690 = vunpack.c.h.b16 %v182
    %v691 = vunpack.c.l.b16 %v183
    %v692 = vunpack.c.l.b16 %v184
    %v693 = vunpack.c.h.b16 %v184
    %v694 = vunpack.c.l.b16 %v185
    %v695 = vunpack.c.l.b16 %v186
    %v696 = vunpack.c.h.b16 %v186
    %v697 = vunpack.c.l.b16 %v187
    %v698 = vunpack.c.l.b16 %v188
    %v699 = vunpack.c.h.b16 %v188
    %v700 = vunpack.c.l.b16 %v189
    %v701 = vunpack.c.l.b16 %v190
    %v702 = vunpack.c.h.b16 %v190
    %v703 = vunpack.c.l.b16 %v191
    %v704 = vunpack.c.l.b16 %v192
    %v705 = vunpack.c.h.b16 %v192
    %v706 = vunpack.c.l.b16 %v193
    %v707 = vunpack.c.l.b16 %v194
    %v708 = vunpack.c.h.b16 %v194
    %v709 = vunpack.c.l.b16 %v195
    %v710 = vunpack.c.l.b16 %v196
    %v711 = vunpack.c.h.b16 %v196
    %v712 = vunpack.c.l.b16 %v197
    %v713 = vunpack.c.l.b16 %v198
    %v714 = vunpack.c.h.b16 %v198
    %v715 = vunpack.c.l.b16 %v199
    %v716 = vunpack.c.l.b16 %v200
    %v717 = vunpack.c.h.b16 %v200
    %v718 = vunpack.c.l.b16 %v201
    %v719 = vunpack.c.l.b16 %v202
    %v720 = vunpack.c.h.b16 %v202
    %v721 = vunpack.c.l.b16 %v203
    %v722 = vunpack.c.l.b16 %v204
    %v723 = vunpack.c.h.b16 %v204
    %v724 = vunpack.c.l.b16 %v205
    %v725 = vunpack.c.l.b16 %v206
    %v726 = vunpack.c.h.b16 %v206
    %v727 = vunpack.c.l.b16 %v207
    %v728 = vunpack.c.l.b16 %v208
    %v729 = vunpack.c.h.b16 %v208
    %v730 = vunpack.c.l.b16 %v209
    %v731 = vunpack.c.l.b16 %v210
    %v732 = vunpack.c.h.b16 %v210
    %v733 = vunpack.c.l.b16 %v211
    %v734 = vunpack.c.l.b16 %v212
    %v735 = vunpack.c.h.b16 %v212
    %v736 = vunpack.c.l.b16 %v213
    %v737 = vunpack.c.l.b16 %v214
    %v738 = vunpack.c.h.b16 %v214
    %v739 = vunpack.c.l.b16 %v215
    %v740 = vunpack.c.l.b16 %v216
    %v741 = vunpack.c.h.b16 %v216
    %v742 = vunpack.c.l.b16 %v217
    %v743 = vunpack.c.l.b16 %v218
    %v744 = vunpack.c.h.b16 %v218
    %v745 = vunpack.c.l.b16 %v219
    %v746 = vunpack.c.l.b16 %v220
    %v747 = vunpack.c.h.b16 %v220
    %v748 = vunpack.c.l.b16 %v221
    %v749 = vunpack.c.l.b16 %v222
    %v750 = vunpack.c.h.b16 %v222
    %v751 = vunpack.c.l.b16 %v223
    %v752 = vunpack.c.l.b16 %v224
    %v753 = vunpack.c.h.b16 %v224
    %v754 = vunpack.c.l.b16 %v225
    %v755 = vunpack.c.l.b16 %v226
    %v756 = vunpack.c.h.b16 %v226
    %v757 = vunpack.c.l.b16 %v227
    %v758 = vunpack.c.l.b16 %v228
    %v759 = vunpack.c.h.b16 %v228
    %v760 = vunpack.c.l.b16 %v229
    %v761 = vunpack.c.l.b16 %v230
    %v762 = vunpack.c.h.b16 %v230
    %v763 = vunpack.c.l.b16 %v231
    %v764 = vunpack.c.l.b16 %v232
    %v765 = vunpack.c.h.b16 %v232
    %v766 = vunpack.c.l.b16 %v233
    %v767 = vunpack.c.l.b16 %v234
    %v768 = vunpack.c.h.b16 %v234
    %v769 = vunpack.c.l.b16 %v235
    %v770 = vunpack.c.l.b16 %v236
    %v771 = vunpack.c.h.b16 %v236
    %v772 = vunpack.c.l.b16 %v237
    %v773 = vunpack.c.l.b16 %v238
    %v774 = vunpack.c.h.b16 %v238
    %v775 = vunpack.c.l.b16 %v239
    %v776 = vunpack.c.l.b16 %v240
    %v777 = vunpack.c.h.b16 %v240
    %v778 = vunpack.c.l.b16 %v241
    %v779 = vunpack.c.l.b16 %v242
    %v780 = vunpack.c.h.b16 %v242
    %v781 = vunpack.c.l.b16 %v243
    %v782 = vunpack.c.l.b16 %v244
    %v783 = vunpack.c.h.b16 %v244
    %v784 = vunpack.c.l.b16 %v245
    %v785 = vunpack.c.l.b16 %v246
    %v786 = vunpack.c.h.b16 %v246
    %v787 = vunpack.c.l.b16 %v247
    %v788 = vunpack.c.l.b16 %v248
    %v789 = vunpack.c.h.b16 %v248
    %v790 = vunpack.c.l.b16 %v249
    %v791 = vunpack.c.l.b16 %v250
    %v792 = vunpack.c.h.b16 %v250
    %v793 = vunpack.c.l.b16 %v251
    %v794 = vunpack.c.l.b16 %v252
    %v795 = vunpack.c.h.b16 %v252
    %v796 = vunpack.c.l.b16 %v253
    %v797 = vunpack.c.l.b16 %v254
    %v798 = vunpack.c.h.b16 %v254
    %v799 = vunpack.c.l.b16 %v255
    %v800 = vunpack.c.l.b16 %v256
    %v801 = vunpack.c.h.b16 %v256
    %v802 = vunpack.c.l.b16 %v257
    %v803 = vunpack.c.l.b16 %v258
    %v804 = vunpack.c.h.b16 %v258
    %v805 = vunpack.c.l.b16 %v259
    %v806 = vunpack.c.l.b16 %v260
    %v807 = vunpack.c.h.b16 %v260
    %v808 = vunpack.c.l.b16 %v261
    %v809 = vunpack.c.l.b16 %v262
    %v810 = vunpack.c.h.b16 %v262
    %v811 = vunpack.c.l.b16 %v263
    %v812 = vunpack.c.l.b16 %v264
    %v813 = vunpack.c.h.b16 %v264
    %v814 = vunpack.c.l.b16 %v265
    %v815 = vunpack.c.l.b16 %v266
    %v816 = vunpack.c.h.b16 %v266
    %v817 = vunpack.c.l.b16 %v267
    %v818 = vunpack.c.l.b16 %v268
    %v819 = vunpack.c.h.b16 %v268
    %v820 = vunpack.c.l.b16 %v269
    %v821 = vunpack.c.l.b16 %v270
    %v822 = vunpack.c.h.b16 %v270
    %v823 = vunpack.c.l.b16 %v271
    %v824 = vunpack.c.l.b16 %v272
    %v825 = vunpack.c.h.b16 %v272
    %v826 = vunpack.c.l.b16 %v273
    %v827 = vunpack.c.l.b16 %v274
    %v828 = vunpack.c.h.b16 %v274
    %v829 = vunpack.c.l.b16 %v275
    %v830 = vunpack.c.l.b16 %v276
    %v831 = vunpack.c.h.b16 %v276
    %v832 = vunpack.c.l.b16 %v277
    %v833 = vunpack.c.l.b16 %v278
    %v834 = vunpack.c.h.b16 %v278
    %v835 = vunpack.c.l.b16 %v279
    %v836 = vunpack.c.l.b16 %v280
    %v837 = vunpack.c.h.b16 %v280
    %v838 = vunpack.c.l.b16 %v281
    %v839 = vunpack.c.l.b16 %v282
    %v840 = vunpack.c.h.b16 %v282
    %v841 = vunpack.c.l.b16 %v283
    %v842 = vunpack.c.l.b16 %v284
    %v843 = vunpack.c.h.b16 %v284
    %v844 = vunpack.c.l.b16 %v285
    %v845 = vunpack.c.l.b16 %v286
    %v846 = vunpack.c.h.b16 %v286
    %v847 = vunpack.c.l.b16 %v287
    %v848 = vunpack.c.l.b16 %v288
    %v849 = vunpack.c.h.b16 %v288
    %v850 = vunpack.c.l.b16 %v289
    %v851 = vunpack.c.l.b16 %v290
    %v852 = vunpack.c.h.b16 %v290
    %v853 = vunpack.c.l.b16 %v291
    %v854 = vunpack.c.l.b16 %v292
    %v855 = vunpack.c.h.b16 %v292
    %v856 = vunpack.c.l.b16 %v293
    %v857 = vunpack.c.l.b16 %v294
    %v858 = vunpack.c.h.b16 %v294
    %v859 = vunpack.c.l.b16 %v295
    %v860 = vunpack.c.l.b16 %v296
    %v861 = vunpack.c.h.b16 %v296
    %v862 = vunpack.c.l.b16 %v297
    %v863 = vunpack.c.l.b16 %v298
    %v864 = vunpack.c.h.b16 %v298
    %v865 = vunpack.c.l.b16 %v299
    %v866 = vunpack.c.l.b16 %v300
    %v867 = vunpack.c.h.b16 %v300
    %v868 = vunpack.c.l.b16 %v301
    %v869 = vunpack.c.l.b16 %v302
    %v870 = vunpack.c.h.b16 %v302
    %v871 = vunpack.c.l.b16 %v303
    %v872 = vunpack.c.l.b16 %v304
    %v873 = vunpack.c.h.b16 %v304
    %v874 = vunpack.c.l.b16 %v305
    %v875 = vunpack.c.l.b16 %v306
    %v876 = vunpack.c.h.b16 %v306
    %v877 = vunpack.c.l.b16 %v307
    %v878 = vunpack.c.l.b16 %v308
    %v879 = vunpack.c.h.b16 %v308
    %v880 = vunpack.c.l.b16 %v309
    %v881 = vunpack.c.l.b16 %v310
    %v882 = vunpack.c.h.b16 %v310
    %v883 = vunpack.c.l.b16 %v311
    %v884 = vunpack.c.l.b16 %v312
    %v885 = vunpack.c.h.b16 %v312
    %v886 = vunpack.c.l.b16 %v313
    %v887 = vunpack.c.l.b16 %v314
    %v888 = vunpack.c.h.b16 %v314
    %v889 = vunpack.c.l.b16 %v315
    %v890 = vunpack.c.l.b16 %v316
    %v891 = vunpack.c.h.b16 %v316
    %v892 = vunpack.c.l.b16 %v317
    %v893 = vunpack.c.l.b16 %v318
    %v894 = vunpack.c.h.b16 %v318
    %v895 = vunpack.c.l.b16 %v319
    %v896 = vunpack.c.l.b16 %v320
    %v897 = vunpack.c.h.b16 %v320
    %v898 = vunpack.c.l.b16 %v321
    %v899 = vpack.c.b16 %v566, %v563
    %v900 = vpack.c.b16 %v567, %v564
    %v901 = vpack.c.b16 %v568, %v565
    %v902 = vpack.c.b16 %v572, %v569
    %v903 = vpack.c.b16 %v573, %v570
    %v904 = vpack.c.b16 %v574, %v571
    %v905 = vpack.c.b16 %v578, %v575
    %v906 = vpack.c.b16 %v579, %v576
    %v907 = vpack.c.b16 %v580, %v577
    %v908 = vpack.c.b16 %v584, %v581
    %v909 = vpack.c.b16 %v585, %v582
    %v910 = vpack.c.b16 %v586, %v583
    %v911 = vpack.c.b16 %v590, %v587
    %v912 = vpack.c.b16 %v591, %v588
    %v913 = vpack.c.b16 %v592, %v589
    %v914 = vpack.c.b16 %v596, %v593
    %v915 = vpack.c.b16 %v597, %v594
    %v916 = vpack.c.b16 %v598, %v595
    %v917 = vpack.c.b16 %v602, %v599
    %v918 = vpack.c.b16 %v603, %v600
    %v919 = vpack.c.b16 %v604, %v601
    %v920 = vpack.c.b16 %v608, %v605
    %v921 = vpack.c.b16 %v609, %v606
    %v922 = vpack.c.b16 %v610, %v607
    %v923 = vpack.c.b16 %v614, %v611
    %v924 = vpack.c.b16 %v615, %v612
    %v925 = vpack.c.b16 %v616, %v613
    %v926 = vpack.c.b16 %v620, %v617
    %v927 = vpack.c.b16 %v621, %v618
    %v928 = vpack.c.b16 %v622, %v619
    %v929 = vpack.c.b16 %v626, %v623
    %v930 = vpack.c.b16 %v627, %v624
    %v931 = vpack.c.b16 %v628, %v625
    %v932 = vpack.c.b16 %v632, %v629
    %v933 = vpack.c.b16 %v633, %v630
    %v934 = vpack.c.b16 %v634, %v631
    %v935 = vpack.c.b16 %v638, %v635
    %v936 = vpack.c.b16 %v639, %v636
    %v937 = vpack.c.b16 %v640, %v637
    %v938 = vpack.c.b16 %v644, %v641
    %v939 = vpack.c.b16 %v645, %v642
    %v940 = vpack.c.b16 %v646, %v643
    %v941 = vpack.c.b16 %v650, %v647
    %v942 = vpack.c.b16 %v651, %v648
    %v943 = vpack.c.b16 %v652, %v649
    %v944 = vpack.c.b16 %v656, %v653
    %v945 = vpack.c.b16 %v657, %v654
    %v946 = vpack.c.b16 %v658, %v655
    %v947 = vpack.c.b16 %v662, %v659
    %v948 = vpack.c.b16 %v663, %v660
    %v949 = vpack.c.b16 %v664, %v661
    %v950 = vpack.c.b16 %v668, %v665
    %v951 = vpack.c.b16 %v669, %v666
    %v952 = vpack.c.b16 %v670, %v667
    %v953 = vpack.c.b16 %v674, %v671
    %v954 = vpack.c.b16 %v675, %v672
    %v955 = vpack.c.b16 %v676, %v673
    %v956 = vpack.c.b16 %v680, %v677
    %v957 = vpack.c.b16 %v681, %v678
    %v958 = vpack.c.b16 %v682, %v679
    %v959 = vpack.c.b16 %v686, %v683
    %v960 = vpack.c.b16 %v687, %v684
    %v961 = vpack.c.b16 %v688, %v685
    %v962 = vpack.c.b16 %v692, %v689
    %v963 = vpack.c.b16 %v693, %v690
    %v964 = vpack.c.b16 %v694, %v691
    %v965 = vpack.c.b16 %v698, %v695
    %v966 = vpack.c.b16 %v699, %v696
    %v967 = vpack.c.b16 %v700, %v697
    %v968 = vpack.c.b16 %v704, %v701
    %v969 = vpack.c.b16 %v705, %v702
    %v970 = vpack.c.b16 %v706, %v703
    %v971 = vpack.c.b16 %v710, %v707
    %v972 = vpack.c.b16 %v711, %v708
    %v973 = vpack.c.b16 %v712, %v709
    %v974 = vpack.c.b16 %v716, %v713
    %v975 = vpack.c.b16 %v717, %v714
    %v976 = vpack.c.b16 %v718, %v715
    %v977 = vpack.c.b16 %v722, %v719
    %v978 = vpack.c.b16 %v723, %v720
    %v979 = vpack.c.b16 %v724, %v721
    %v980 = vpack.c.b16 %v728, %v725
    %v981 = vpack.c.b16 %v729, %v726
    %v982 = vpack.c.b16 %v730, %v727
    %v983 = vpack.c.b16 %v734, %v731
    %v984 = vpack.c.b16 %v735, %v732
    %v985 = vpack.c.b16 %v736, %v733
    %v986 = vpack.c.b16 %v740, %v737
    %v987 = vpack.c.b16 %v741, %v738
    %v988 = vpack.c.b16 %v742, %v739
    %v989 = vpack.c.b16 %v746, %v743
    %v990 = vpack.c.b16 %v747, %v744
    %v991 = vpack.c.b16 %v748, %v745
    %v992 = vpack.c.b16 %v752, %v749
    %v993 = vpack.c.b16 %v753, %v750
    %v994 = vpack.c.b16 %v754, %v751
    %v995 = vpack.c.b16 %v758, %v755
    %v996 = vpack.c.b16 %v759, %v756
    %v997 = vpack.c.b16 %v760, %v757
    %v998 = vpack.c.b16 %v764, %v761
    %v999 = vpack.c.b16 %v765, %v762
    %v1000 = vpack.c.b16 %v766, %v763
    %v1001 = vpack.c.b16 %v770, %v767
    %v1002 = vpack.c.b16 %v771, %v768
    %v1003 = vpack.c.b16 %v772, %v769
    %v1004 = vpack.c.b16 %v776, %v773
    %v1005 = vpack.c.b16 %v777, %v774
    %v1006 = vpack.c.b16 %v778, %v775
    %v1007 = vpack.c.b16 %v782, %v779
    %v1008 = vpack.c.b16 %v783, %v780
    %v1009 = vpack.c.b16 %v784, %v781
    %v1010 = vpack.c.b16 %v788, %v785
    %v1011 = vpack.c.b16 %v789, %v786
    %v1012 = vpack.c.b16 %v790, %v787
    %v1013 = vpack.c.b16 %v794, %v791
    %v1014 = vpack.c.b16 %v795, %v792
    %v1015 = vpack.c.b16 %v796, %v793
    %v1016 = vpack.c.b16 %v800, %v797
    %v1017 = vpack.c.b16 %v801, %v798
    %v1018 = vpack.c.b16 %v802, %v799
    %v1019 = vpack.c.b16 %v806, %v803
    %v1020 = vpack.c.b16 %v807, %v804
    %v1021 = vpack.c.b16 %v808, %v805
    %v1022 = vpack.c.b16 %v812, %v809
    %v1023 = vpack.c.b16 %v813, %v810
    %v1024 = vpack.c.b16 %v814, %v811
    %v1025 = vpack.c.b16 %v818, %v815
    %v1026 = vpack.c.b16 %v819, %v816
    %v1027 = vpack.c.b16 %v820, %v817
    %v1028 = vpack.c.b16 %v824, %v821
    %v1029 = vpack.c.b16 %v825, %v822
    %v1030 = vpack.c.b16 %v826, %v823
    %v1031 = vpack.c.b16 %v830, %v827
    %v1032 = vpack.c.b16 %v831, %v828
    %v1033 = vpack.c.b16 %v832, %v829
    %v1034 = vpack.c.b16 %v836, %v833
    %v1035 = vpack.c.b16 %v837, %v834
    %v1036 = vpack.c.b16 %v838, %v835
    %v1037 = vpack.c.b16 %v842, %v839
    %v1038 = vpack.c.b16 %v843, %v840
    %v1039 = vpack.c.b16 %v844, %v841
    %v1040 = vpack.c.b16 %v848, %v845
    %v1041 = vpack.c.b16 %v849, %v846
    %v1042 = vpack.c.b16 %v850, %v847
    %v1043 = vpack.c.b16 %v854, %v851
    %v1044 = vpack.c.b16 %v855, %v852
    %v1045 = vpack.c.b16 %v856, %v853
    %v1046 = vpack.c.b16 %v860, %v857
    %v1047 = vpack.c.b16 %v861, %v858
    %v1048 = vpack.c.b16 %v862, %v859
    %v1049 = vpack.c.b16 %v866, %v863
    %v1050 = vpack.c.b16 %v867, %v864
    %v1051 = vpack.c.b16 %v868, %v865
    %v1052 = vpack.c.b16 %v872, %v869
    %v1053 = vpack.c.b16 %v873, %v870
    %v1054 = vpack.c.b16 %v874, %v871
    %v1055 = vpack.c.b16 %v878, %v875
    %v1056 = vpack.c.b16 %v879, %v876
    %v1057 = vpack.c.b16 %v880, %v877
    %v1058 = vpack.c.b16 %v884, %v881
    %v1059 = vpack.c.b16 %v885, %v882
    %v1060 = vpack.c.b16 %v886, %v883
    %v1061 = vpack.c.b16 %v890, %v887
    %v1062 = vpack.c.b16 %v891, %v888
    %v1063 = vpack.c.b16 %v892, %v889
    %v1064 = vpack.c.b16 %v896, %v893
    %v1065 = vpack.c.b16 %v897, %v894
    %v1066 = vpack.c.b16 %v898, %v895
    %1235 = vmatprep.subr.bf16.mxu0 %v900
    %1236 = vmatpush1.bf16.msra.mxu0 %v899
    %1237 = vmatprep.subr.bf16.mxu0 %v903
    %1238 = vmatpush1.bf16.msra.mxu0 %v902
    %1239 = vmatprep.subr.bf16.mxu0 %v906
    %1240 = vmatpush1.bf16.msra.mxu0 %v905
    %1241 = vmatprep.subr.bf16.mxu0 %v909
    %1242 = vmatpush1.bf16.msra.mxu0 %v908
    %1243 = vmatprep.subr.bf16.mxu0 %v912
    %1244 = vmatpush1.bf16.msra.mxu0 %v911
    %1245 = vmatprep.subr.bf16.mxu0 %v915
    %1246 = vmatpush1.bf16.msra.mxu0 %v914
    %1247 = vmatprep.subr.bf16.mxu0 %v918
    %1248 = vmatpush1.bf16.msra.mxu0 %v917
    %1249 = vmatprep.subr.bf16.mxu0 %v921
    %1250 = vmatpush1.bf16.msra.mxu0 %v920
    %1251 = vmatprep.subr.bf16.mxu0 %v924
    %1252 = vmatpush1.bf16.msra.mxu0 %v923
    %1253 = vmatprep.subr.bf16.mxu0 %v927
    %1254 = vmatpush1.bf16.msra.mxu0 %v926
    %1255 = vmatprep.subr.bf16.mxu0 %v930
    %1256 = vmatpush1.bf16.msra.mxu0 %v929
    %1257 = vmatprep.subr.bf16.mxu0 %v933
    %1258 = vmatpush1.bf16.msra.mxu0 %v932
    %1259 = vmatprep.subr.bf16.mxu0 %v936
    %1260 = vmatpush1.bf16.msra.mxu0 %v935
    %1261 = vmatprep.subr.bf16.mxu0 %v939
    %1262 = vmatpush1.bf16.msra.mxu0 %v938
    %1263 = vmatprep.subr.bf16.mxu0 %v942
    %1264 = vmatpush1.bf16.msra.mxu0 %v941
    %1265 = vmatprep.subr.bf16.mxu0 %v945
    %1266 = vmatpush1.bf16.msra.mxu0 %v944
    %1267 = vmatprep.mubr.bf16.mxu0 %v92
    %1268 = vmatmul.mubr.bf16.gmra.mrb[0].mxu0 %v91
    %v1269 = vpop.f32.mrb[0].mxu0
    %v1270 = vadd.f32 %v327, %v1269
    %v1271 = vpop.f32.mrb[0].mxu0
    %v1272 = vadd.f32 %v331, %v1271
    %v1273 = vpop.f32.mrb[0].mxu0
    %v1274 = vpop.f32.mrb[0].mxu0
    %1275 = vdwg.mxu0
    %1276 = vmatprep.subr.bf16.mxu0 %v948
    %1277 = vmatpush1.bf16.msra.mxu0 %v947
    %1278 = vmatprep.subr.bf16.mxu0 %v951
    %1279 = vmatpush1.bf16.msra.mxu0 %v950
    %1280 = vmatprep.subr.bf16.mxu0 %v954
    %1281 = vmatpush1.bf16.msra.mxu0 %v953
    %1282 = vmatprep.subr.bf16.mxu0 %v957
    %1283 = vmatpush1.bf16.msra.mxu0 %v956
    %1284 = vmatprep.subr.bf16.mxu0 %v960
    %1285 = vmatpush1.bf16.msra.mxu0 %v959
    %1286 = vmatprep.subr.bf16.mxu0 %v963
    %1287 = vmatpush1.bf16.msra.mxu0 %v962
    %1288 = vmatprep.subr.bf16.mxu0 %v966
    %1289 = vmatpush1.bf16.msra.mxu0 %v965
    %1290 = vmatprep.subr.bf16.mxu0 %v969
    %1291 = vmatpush1.bf16.msra.mxu0 %v968
    %1292 = vmatprep.subr.bf16.mxu0 %v972
    %1293 = vmatpush1.bf16.msra.mxu0 %v971
    %1294 = vmatprep.subr.bf16.mxu0 %v975
    %1295 = vmatpush1.bf16.msra.mxu0 %v974
    %1296 = vmatprep.subr.bf16.mxu0 %v978
    %1297 = vmatpush1.bf16.msra.mxu0 %v977
    %1298 = vmatprep.subr.bf16.mxu0 %v981
    %1299 = vmatpush1.bf16.msra.mxu0 %v980
    %1300 = vmatprep.subr.bf16.mxu0 %v984
    %1301 = vmatpush1.bf16.msra.mxu0 %v983
    %1302 = vmatprep.subr.bf16.mxu0 %v987
    %1303 = vmatpush1.bf16.msra.mxu0 %v986
    %1304 = vmatprep.subr.bf16.mxu0 %v990
    %1305 = vmatpush1.bf16.msra.mxu0 %v989
    %1306 = vmatprep.subr.bf16.mxu0 %v993
    %1307 = vmatpush1.bf16.msra.mxu0 %v992
    %1308 = vmatprep.mubr.bf16.mxu0 %v94
    %1309 = vmatmul.mubr.bf16.gmra.mrb[0].mxu0 %v93
    %v1310 = vpop.f32.mrb[0].mxu0
    %v1311 = vadd.f32 %v1270, %v1310
    %v1312 = vpop.f32.mrb[0].mxu0
    %v1313 = vadd.f32 %v1272, %v1312
    %v1314 = vpop.f32.mrb[0].mxu0
    %v1315 = vpop.f32.mrb[0].mxu0
    %1316 = vdwg.mxu0
    %1317 = vmatprep.subr.bf16.mxu0 %v996
    %1318 = vmatpush1.bf16.msra.mxu0 %v995
    %1319 = vmatprep.subr.bf16.mxu0 %v999
    %1320 = vmatpush1.bf16.msra.mxu0 %v998
    %1321 = vmatprep.subr.bf16.mxu0 %v1002
    %1322 = vmatpush1.bf16.msra.mxu0 %v1001
    %1323 = vmatprep.subr.bf16.mxu0 %v1005
    %1324 = vmatpush1.bf16.msra.mxu0 %v1004
    %1325 = vmatprep.subr.bf16.mxu0 %v1008
    %1326 = vmatpush1.bf16.msra.mxu0 %v1007
    %1327 = vmatprep.subr.bf16.mxu0 %v1011
    %1328 = vmatpush1.bf16.msra.mxu0 %v1010
    %1329 = vmatprep.subr.bf16.mxu0 %v1014
    %1330 = vmatpush1.bf16.msra.mxu0 %v1013
    %1331 = vmatprep.subr.bf16.mxu0 %v1017
    %1332 = vmatpush1.bf16.msra.mxu0 %v1016
    %1333 = vmatprep.subr.bf16.mxu0 %v1020
    %1334 = vmatpush1.bf16.msra.mxu0 %v1019
    %1335 = vmatprep.subr.bf16.mxu0 %v1023
    %1336 = vmatpush1.bf16.msra.mxu0 %v1022
    %1337 = vmatprep.subr.bf16.mxu0 %v1026
    %1338 = vmatpush1.bf16.msra.mxu0 %v1025
    %1339 = vmatprep.subr.bf16.mxu0 %v1029
    %1340 = vmatpush1.bf16.msra.mxu0 %v1028
    %1341 = vmatprep.subr.bf16.mxu0 %v1032
    %1342 = vmatpush1.bf16.msra.mxu0 %v1031
    %1343 = vmatprep.subr.bf16.mxu0 %v1035
    %1344 = vmatpush1.bf16.msra.mxu0 %v1034
    %1345 = vmatprep.subr.bf16.mxu0 %v1038
    %1346 = vmatpush1.bf16.msra.mxu0 %v1037
    %1347 = vmatprep.subr.bf16.mxu0 %v1041
    %1348 = vmatpush1.bf16.msra.mxu0 %v1040
    %1349 = vmatprep.mubr.bf16.mxu0 %v96
    %1350 = vmatmul.mubr.bf16.gmra.mrb[0].mxu0 %v95
    %v1351 = vpop.f32.mrb[0].mxu0
    %v1352 = vadd.f32 %v1311, %v1351
    %v1353 = vpop.f32.mrb[0].mxu0
    %v1354 = vadd.f32 %v1313, %v1353
    %v1355 = vpop.f32.mrb[0].mxu0
    %v1356 = vpop.f32.mrb[0].mxu0
    %1357 = vdwg.mxu0
    %1358 = vmatprep.subr.bf16.mxu0 %v1044
    %1359 = vmatpush1.bf16.msra.mxu0 %v1043
    %1360 = vmatprep.subr.bf16.mxu0 %v1047
    %1361 = vmatpush1.bf16.msra.mxu0 %v1046
    %1362 = vmatprep.subr.bf16.mxu0 %v1050
    %1363 = vmatpush1.bf16.msra.mxu0 %v1049
    %1364 = vmatprep.subr.bf16.mxu0 %v1053
    %1365 = vmatpush1.bf16.msra.mxu0 %v1052
    %1366 = vmatprep.subr.bf16.mxu0 %v1056
    %1367 = vmatpush1.bf16.msra.mxu0 %v1055
    %1368 = vmatprep.subr.bf16.mxu0 %v1059
    %1369 = vmatpush1.bf16.msra.mxu0 %v1058
    %1370 = vmatprep.subr.bf16.mxu0 %v1062
    %1371 = vmatpush1.bf16.msra.mxu0 %v1061
    %1372 = vmatprep.subr.bf16.mxu0 %v1065
    %1373 = vmatpush1.bf16.msra.mxu0 %v1064
    %1374 = vmatprep.subr.bf16.mxu0 0
    %1375 = vmatpush1.bf16.msra.mxu0 0
    %1376 = vmatprep.subr.bf16.mxu0 0
    %1377 = vmatpush1.bf16.msra.mxu0 0
    %1378 = vmatprep.subr.bf16.mxu0 0
    %1379 = vmatpush1.bf16.msra.mxu0 0
    %1380 = vmatprep.subr.bf16.mxu0 0
    %1381 = vmatpush1.bf16.msra.mxu0 0
    %1382 = vmatprep.subr.bf16.mxu0 0
    %1383 = vmatpush1.bf16.msra.mxu0 0
    %1384 = vmatprep.subr.bf16.mxu0 0
    %1385 = vmatpush1.bf16.msra.mxu0 0
    %1386 = vmatprep.subr.bf16.mxu0 0
    %1387 = vmatpush1.bf16.msra.mxu0 0
    %1388 = vmatprep.subr.bf16.mxu0 0
    %1389 = vmatpush1.bf16.msra.mxu0 0
    %1390 = vmatprep.mubr.bf16.mxu0 0
    %1391 = vmatmul.mubr.bf16.gmra.mrb[0].mxu0 %v97
    %v1392 = vpop.f32.mrb[0].mxu0
    %v1393 = vadd.f32 %v1352, %v1392
    %v1394 = vpop.f32.mrb[0].mxu0
    %v1395 = vadd.f32 %v1354, %v1394
    %v1396 = vpop.f32.mrb[0].mxu0
    %v1397 = vpop.f32.mrb[0].mxu0
    %1398 = vdwg.mxu0
    %1399 = vmatprep.subr.bf16.mxu0 0
    %1400 = vmatpush1.bf16.msra.mxu0 %v901
    %1401 = vmatprep.subr.bf16.mxu0 0
    %1402 = vmatpush1.bf16.msra.mxu0 %v904
    %1403 = vmatprep.subr.bf16.mxu0 0
    %1404 = vmatpush1.bf16.msra.mxu0 %v907
    %1405 = vmatprep.subr.bf16.mxu0 0
    %1406 = vmatpush1.bf16.msra.mxu0 %v910
    %1407 = vmatprep.subr.bf16.mxu0 0
    %1408 = vmatpush1.bf16.msra.mxu0 %v913
    %1409 = vmatprep.subr.bf16.mxu0 0
    %1410 = vmatpush1.bf16.msra.mxu0 %v916
    %1411 = vmatprep.subr.bf16.mxu0 0
    %1412 = vmatpush1.bf16.msra.mxu0 %v919
    %1413 = vmatprep.subr.bf16.mxu0 0
    %1414 = vmatpush1.bf16.msra.mxu0 %v922
    %1415 = vmatprep.subr.bf16.mxu0 0
    %1416 = vmatpush1.bf16.msra.mxu0 %v925
    %1417 = vmatprep.subr.bf16.mxu0 0
    %1418 = vmatpush1.bf16.msra.mxu0 %v928
    %1419 = vmatprep.subr.bf16.mxu0 0
    %1420 = vmatpush1.bf16.msra.mxu0 %v931
    %1421 = vmatprep.subr.bf16.mxu0 0
    %1422 = vmatpush1.bf16.msra.mxu0 %v934
    %1423 = vmatprep.subr.bf16.mxu0 0
    %1424 = vmatpush1.bf16.msra.mxu0 %v937
    %1425 = vmatprep.subr.bf16.mxu0 0
    %1426 = vmatpush1.bf16.msra.mxu0 %v940
    %1427 = vmatprep.subr.bf16.mxu0 0
    %1428 = vmatpush1.bf16.msra.mxu0 %v943
    %1429 = vmatprep.subr.bf16.mxu0 0
    %1430 = vmatpush1.bf16.msra.mxu0 %v946
    %1431 = vmatprep.mubr.bf16.mxu0 %v92
    %1432 = vmatmul.mubr.bf16.gmra.mrb[0].mxu0 %v91
    %v1433 = vpop.f32.mrb[0].mxu0
    %v1434 = vadd.f32 %v335, %v1433
    %v1435 = vpop.f32.mrb[0].mxu0
    %v1436 = vpop.f32.mrb[0].mxu0
    %v1437 = vpop.f32.mrb[0].mxu0
    %1438 = vdwg.mxu0
    %1439 = vmatprep.subr.bf16.mxu0 0
    %1440 = vmatpush1.bf16.msra.mxu0 %v949
    %1441 = vmatprep.subr.bf16.mxu0 0
    %1442 = vmatpush1.bf16.msra.mxu0 %v952
    %1443 = vmatprep.subr.bf16.mxu0 0
    %1444 = vmatpush1.bf16.msra.mxu0 %v955
    %1445 = vmatprep.subr.bf16.mxu0 0
    %1446 = vmatpush1.bf16.msra.mxu0 %v958
    %1447 = vmatprep.subr.bf16.mxu0 0
    %1448 = vmatpush1.bf16.msra.mxu0 %v961
    %1449 = vmatprep.subr.bf16.mxu0 0
    %1450 = vmatpush1.bf16.msra.mxu0 %v964
    %1451 = vmatprep.subr.bf16.mxu0 0
    %1452 = vmatpush1.bf16.msra.mxu0 %v967
    %1453 = vmatprep.subr.bf16.mxu0 0
    %1454 = vmatpush1.bf16.msra.mxu0 %v970
    %1455 = vmatprep.subr.bf16.mxu0 0
    %1456 = vmatpush1.bf16.msra.mxu0 %v973
    %1457 = vmatprep.subr.bf16.mxu0 0
    %1458 = vmatpush1.bf16.msra.mxu0 %v976
    %1459 = vmatprep.subr.bf16.mxu0 0
    %1460 = vmatpush1.bf16.msra.mxu0 %v979
    %1461 = vmatprep.subr.bf16.mxu0 0
    %1462 = vmatpush1.bf16.msra.mxu0 %v982
    %1463 = vmatprep.subr.bf16.mxu0 0
    %1464 = vmatpush1.bf16.msra.mxu0 %v985
    %1465 = vmatprep.subr.bf16.mxu0 0
    %1466 = vmatpush1.bf16.msra.mxu0 %v988
    %1467 = vmatprep.subr.bf16.mxu0 0
    %1468 = vmatpush1.bf16.msra.mxu0 %v991
    %1469 = vmatprep.subr.bf16.mxu0 0
    %1470 = vmatpush1.bf16.msra.mxu0 %v994
    %1471 = vmatprep.mubr.bf16.mxu0 %v94
    %1472 = vmatmul.mubr.bf16.gmra.mrb[0].mxu0 %v93
    %v1473 = vpop.f32.mrb[0].mxu0
    %v1474 = vadd.f32 %v1434, %v1473
    %v1475 = vpop.f32.mrb[0].mxu0
    %v1476 = vpop.f32.mrb[0].mxu0
    %v1477 = vpop.f32.mrb[0].mxu0
    %1478 = vdwg.mxu0
    %1479 = vmatprep.subr.bf16.mxu0 0
    %1480 = vmatpush1.bf16.msra.mxu0 %v997
    %1481 = vmatprep.subr.bf16.mxu0 0
    %1482 = vmatpush1.bf16.msra.mxu0 %v1000
    %1483 = vmatprep.subr.bf16.mxu0 0
    %1484 = vmatpush1.bf16.msra.mxu0 %v1003
    %1485 = vmatprep.subr.bf16.mxu0 0
    %1486 = vmatpush1.bf16.msra.mxu0 %v1006
    %1487 = vmatprep.subr.bf16.mxu0 0
    %1488 = vmatpush1.bf16.msra.mxu0 %v1009
    %1489 = vmatprep.subr.bf16.mxu0 0
    %1490 = vmatpush1.bf16.msra.mxu0 %v1012
    %1491 = vmatprep.subr.bf16.mxu0 0
    %1492 = vmatpush1.bf16.msra.mxu0 %v1015
    %1493 = vmatprep.subr.bf16.mxu0 0
    %1494 = vmatpush1.bf16.msra.mxu0 %v1018
    %1495 = vmatprep.subr.bf16.mxu0 0
    %1496 = vmatpush1.bf16.msra.mxu0 %v1021
    %1497 = vmatprep.subr.bf16.mxu0 0
    %1498 = vmatpush1.bf16.msra.mxu0 %v1024
    %1499 = vmatprep.subr.bf16.mxu0 0
    %1500 = vmatpush1.bf16.msra.mxu0 %v1027
    %1501 = vmatprep.subr.bf16.mxu0 0
    %1502 = vmatpush1.bf16.msra.mxu0 %v1030
    %1503 = vmatprep.subr.bf16.mxu0 0
    %1504 = vmatpush1.bf16.msra.mxu0 %v1033
    %1505 = vmatprep.subr.bf16.mxu0 0
    %1506 = vmatpush1.bf16.msra.mxu0 %v1036
    %1507 = vmatprep.subr.bf16.mxu0 0
    %1508 = vmatpush1.bf16.msra.mxu0 %v1039
    %1509 = vmatprep.subr.bf16.mxu0 0
    %1510 = vmatpush1.bf16.msra.mxu0 %v1042
    %1511 = vmatprep.mubr.bf16.mxu0 %v96
    %1512 = vmatmul.mubr.bf16.gmra.mrb[0].mxu0 %v95
    %v1513 = vpop.f32.mrb[0].mxu0
    %v1514 = vadd.f32 %v1474, %v1513
    %v1515 = vpop.f32.mrb[0].mxu0
    %v1516 = vpop.f32.mrb[0].mxu0
    %v1517 = vpop.f32.mrb[0].mxu0
    %1518 = vdwg.mxu0
    %1519 = vmatprep.subr.bf16.mxu0 0
    %1520 = vmatpush1.bf16.msra.mxu0 %v1045
    %1521 = vmatprep.subr.bf16.mxu0 0
    %1522 = vmatpush1.bf16.msra.mxu0 %v1048
    %1523 = vmatprep.subr.bf16.mxu0 0
    %1524 = vmatpush1.bf16.msra.mxu0 %v1051
    %1525 = vmatprep.subr.bf16.mxu0 0
    %1526 = vmatpush1.bf16.msra.mxu0 %v1054
    %1527 = vmatprep.subr.bf16.mxu0 0
    %1528 = vmatpush1.bf16.msra.mxu0 %v1057
    %1529 = vmatprep.subr.bf16.mxu0 0
    %1530 = vmatpush1.bf16.msra.mxu0 %v1060
    %1531 = vmatprep.subr.bf16.mxu0 0
    %1532 = vmatpush1.bf16.msra.mxu0 %v1063
    %1533 = vmatprep.subr.bf16.mxu0 0
    %1534 = vmatpush1.bf16.msra.mxu0 %v1066
    %1535 = vmatprep.subr.bf16.mxu0 0
    %1536 = vmatpush1.bf16.msra.mxu0 0
    %1537 = vmatprep.subr.bf16.mxu0 0
    %1538 = vmatpush1.bf16.msra.mxu0 0
    %1539 = vmatprep.subr.bf16.mxu0 0
    %1540 = vmatpush1.bf16.msra.mxu0 0
    %1541 = vmatprep.subr.bf16.mxu0 0
    %1542 = vmatpush1.bf16.msra.mxu0 0
    %1543 = vmatprep.subr.bf16.mxu0 0
    %1544 = vmatpush1.bf16.msra.mxu0 0
    %1545 = vmatprep.subr.bf16.mxu0 0
    %1546 = vmatpush1.bf16.msra.mxu0 0
    %1547 = vmatprep.subr.bf16.mxu0 0
    %1548 = vmatpush1.bf16.msra.mxu0 0
    %1549 = vmatprep.subr.bf16.mxu0 0
    %1550 = vmatpush1.bf16.msra.mxu0 0
    %1551 = vmatprep.mubr.bf16.mxu0 0
    %1552 = vmatmul.mubr.bf16.gmra.mrb[0].mxu0 %v97
    %v1553 = vpop.f32.mrb[0].mxu0
    %v1554 = vadd.f32 %v1514, %v1553
    %v1555 = vpop.f32.mrb[0].mxu0
    %v1556 = vpop.f32.mrb[0].mxu0
    %v1557 = vpop.f32.mrb[0].mxu0
    %1558 = vdwg.mxu0
    %v1559 = vmax.f32 %v1393, 0.0
    %v1560 = vmax.f32 %v1395, 0.0
    %v1561 = vmax.f32 %v1554, 0.0
    %v1562 = vpack.c.bf16 %v1559, %v1559
    %v1563 = vpack.c.bf16 %v1560, %v1560
    %v1564 = vpack.c.bf16 %v1561, %v1561
    %v1565 = vld [vmem:[#allocation7] sm:$0xf]
    %v1566 = vld [vmem:[#allocation7 + $0x4] sm:$0xf]
    %v1567 = vld [vmem:[#allocation7 + $0x8] sm:$0xf]
    %v1568 = vld [vmem:[#allocation7 + $0xc] sm:$0xf]
    %v1569 = vld [vmem:[#allocation7 + $0x10] sm:$0xf]
    %v1570 = vld [vmem:[#allocation7 + $0x14] sm:$0xf]
    %v1571 = vld [vmem:[#allocation7 + $0x18] sm:$0xf]
    %v1572 = vld [vmem:[#allocation7 + $0x1c] sm:$0xf]
    %v1573 = vld [vmem:[#allocation7 + $0x20] sm:$0xf]
    %v1574 = vld [vmem:[#allocation7 + $0x24] sm:$0xf]
    %v1575 = vld [vmem:[#allocation7 + $0x28] sm:$0xf]
    %v1576 = vld [vmem:[#allocation7 + $0x2c] sm:$0xf]
    %v1577 = vld [vmem:[#allocation7 + $0x30] sm:$0xf]
    %v1578 = vld [vmem:[#allocation7 + $0x34] sm:$0xf]
    %v1579 = vld [vmem:[#allocation7 + $0x38] sm:$0xf]
    %v1580 = vld [vmem:[#allocation7 + $0x3c] sm:$0xf]
    %v1581 = vld [vmem:[#allocation7 + $0x40] sm:$0xf]
    %v1582 = vld [vmem:[#allocation7 + $0x44] sm:$0xf]
    %v1583 = vld [vmem:[#allocation7 + $0x48] sm:$0xf]
    %v1584 = vld [vmem:[#allocation7 + $0x4c] sm:$0xf]
    %v1585 = vld [vmem:[#allocation7 + $0x50] sm:$0xf]
    %v1586 = vld [vmem:[#allocation7 + $0x54] sm:$0xf]
    %v1587 = vld [vmem:[#allocation7 + $0x58] sm:$0xf]
    %v1588 = vld [vmem:[#allocation7 + $0x5c] sm:$0xf]
    %v1589 = vld [vmem:[#allocation7 + $0x60] sm:$0xf]
    %v1590 = vld [vmem:[#allocation7 + $0x64] sm:$0xf]
    %v1591 = vld [vmem:[#allocation7 + $0x68] sm:$0xf]
    %v1592 = vld [vmem:[#allocation7 + $0x6c] sm:$0xf]
    %v1593 = vld [vmem:[#allocation7 + $0x70] sm:$0xf]
    %v1594 = vld [vmem:[#allocation7 + $0x74] sm:$0xf]
    %v1595 = vld [vmem:[#allocation7 + $0x78] sm:$0xf]
    %v1596 = vld [vmem:[#allocation7 + $0x7c] sm:$0xf]
    %v1597 = vld [vmem:[#allocation7 + $0x80] sm:$0xf]
    %v1598 = vld [vmem:[#allocation7 + $0x84] sm:$0xf]
    %v1599 = vld [vmem:[#allocation7 + $0x88] sm:$0xf]
    %v1600 = vld [vmem:[#allocation7 + $0x8c] sm:$0xf]
    %v1601 = vld [vmem:[#allocation7 + $0x90] sm:$0xf]
    %v1602 = vld [vmem:[#allocation7 + $0x94] sm:$0xf]
    %v1603 = vld [vmem:[#allocation7 + $0x98] sm:$0xf]
    %v1604 = vld [vmem:[#allocation7 + $0x9c] sm:$0xf]
    %v1605 = vld [vmem:[#allocation7 + $0xa0] sm:$0xf]
    %v1606 = vld [vmem:[#allocation7 + $0xa4] sm:$0xf]
    %v1607 = vld [vmem:[#allocation7 + $0xa8] sm:$0xf]
    %v1608 = vld [vmem:[#allocation7 + $0xac] sm:$0xf]
    %v1609 = vld [vmem:[#allocation7 + $0xb0] sm:$0xf]
    %v1610 = vld [vmem:[#allocation7 + $0xb4] sm:$0xf]
    %v1611 = vld [vmem:[#allocation7 + $0xb8] sm:$0xf]
    %v1612 = vld [vmem:[#allocation7 + $0xbc] sm:$0xf]
    %v1613 = vld [vmem:[%s4] sm:$0x1]
    %v1615 = vlaneseq
    %v1616 = vshrl.u32 %v1615, 7
    %v1617 = vsub.s32 0, %v1616
    %v1618 = vrot.slane %v1613, %v1617
    %v1668 = vunpack.c.l.b16 %v1565
    %v1669 = vunpack.c.l.b16 %v1566
    %v1670 = vunpack.c.l.b16 %v1567
    %v1671 = vunpack.c.l.b16 %v1568
    %v1672 = vunpack.c.l.b16 %v1569
    %v1673 = vunpack.c.l.b16 %v1570
    %v1674 = vunpack.c.l.b16 %v1571
    %v1675 = vunpack.c.l.b16 %v1572
    %v1676 = vunpack.c.l.b16 %v1573
    %v1677 = vunpack.c.l.b16 %v1574
    %v1678 = vunpack.c.l.b16 %v1575
    %v1679 = vunpack.c.l.b16 %v1576
    %v1680 = vunpack.c.l.b16 %v1577
    %v1681 = vunpack.c.l.b16 %v1578
    %v1682 = vunpack.c.l.b16 %v1579
    %v1683 = vunpack.c.l.b16 %v1580
    %v1684 = vunpack.c.l.b16 %v1581
    %v1685 = vunpack.c.l.b16 %v1582
    %v1686 = vunpack.c.l.b16 %v1583
    %v1687 = vunpack.c.l.b16 %v1584
    %v1688 = vunpack.c.l.b16 %v1585
    %v1689 = vunpack.c.l.b16 %v1586
    %v1690 = vunpack.c.l.b16 %v1587
    %v1691 = vunpack.c.l.b16 %v1588
    %v1692 = vunpack.c.l.b16 %v1589
    %v1693 = vunpack.c.l.b16 %v1590
    %v1694 = vunpack.c.l.b16 %v1591
    %v1695 = vunpack.c.l.b16 %v1592
    %v1696 = vunpack.c.l.b16 %v1593
    %v1697 = vunpack.c.l.b16 %v1594
    %v1698 = vunpack.c.l.b16 %v1595
    %v1699 = vunpack.c.l.b16 %v1596
    %v1700 = vunpack.c.l.b16 %v1597
    %v1701 = vunpack.c.l.b16 %v1598
    %v1702 = vunpack.c.l.b16 %v1599
    %v1703 = vunpack.c.l.b16 %v1600
    %v1704 = vunpack.c.l.b16 %v1601
    %v1705 = vunpack.c.l.b16 %v1602
    %v1706 = vunpack.c.l.b16 %v1603
    %v1707 = vunpack.c.l.b16 %v1604
    %v1708 = vunpack.c.l.b16 %v1605
    %v1709 = vunpack.c.l.b16 %v1606
    %v1710 = vunpack.c.l.b16 %v1607
    %v1711 = vunpack.c.l.b16 %v1608
    %v1712 = vunpack.c.l.b16 %v1609
    %v1713 = vunpack.c.l.b16 %v1610
    %v1714 = vunpack.c.l.b16 %v1611
    %v1715 = vunpack.c.l.b16 %v1612
    %v1716 = vpack.c.b16 %v1669, %v1668
    %v1717 = vpack.c.b16 %v1671, %v1670
    %v1718 = vpack.c.b16 %v1673, %v1672
    %v1719 = vpack.c.b16 %v1675, %v1674
    %v1720 = vpack.c.b16 %v1677, %v1676
    %v1721 = vpack.c.b16 %v1679, %v1678
    %v1722 = vpack.c.b16 %v1681, %v1680
    %v1723 = vpack.c.b16 %v1683, %v1682
    %v1724 = vpack.c.b16 %v1685, %v1684
    %v1725 = vpack.c.b16 %v1687, %v1686
    %v1726 = vpack.c.b16 %v1689, %v1688
    %v1727 = vpack.c.b16 %v1691, %v1690
    %v1728 = vpack.c.b16 %v1693, %v1692
    %v1729 = vpack.c.b16 %v1695, %v1694
    %v1730 = vpack.c.b16 %v1697, %v1696
    %v1731 = vpack.c.b16 %v1699, %v1698
    %v1732 = vpack.c.b16 %v1701, %v1700
    %v1733 = vpack.c.b16 %v1703, %v1702
    %v1734 = vpack.c.b16 %v1705, %v1704
    %v1735 = vpack.c.b16 %v1707, %v1706
    %v1736 = vpack.c.b16 %v1709, %v1708
    %v1737 = vpack.c.b16 %v1711, %v1710
    %v1738 = vpack.c.b16 %v1713, %v1712
    %v1739 = vpack.c.b16 %v1715, %v1714
    %1764 = vmatprep.subr.bf16.mxu0 0
    %1765 = vmatpush1.bf16.msra.mxu0 %v1716
    %1766 = vmatprep.subr.bf16.mxu0 0
    %1767 = vmatpush1.bf16.msra.mxu0 %v1717
    %1768 = vmatprep.subr.bf16.mxu0 0
    %1769 = vmatpush1.bf16.msra.mxu0 %v1718
    %1770 = vmatprep.subr.bf16.mxu0 0
    %1771 = vmatpush1.bf16.msra.mxu0 %v1719
    %1772 = vmatprep.subr.bf16.mxu0 0
    %1773 = vmatpush1.bf16.msra.mxu0 %v1720
    %1774 = vmatprep.subr.bf16.mxu0 0
    %1775 = vmatpush1.bf16.msra.mxu0 %v1721
    %1776 = vmatprep.subr.bf16.mxu0 0
    %1777 = vmatpush1.bf16.msra.mxu0 %v1722
    %1778 = vmatprep.subr.bf16.mxu0 0
    %1779 = vmatpush1.bf16.msra.mxu0 %v1723
    %1780 = vmatprep.subr.bf16.mxu0 0
    %1781 = vmatpush1.bf16.msra.mxu0 %v1724
    %1782 = vmatprep.subr.bf16.mxu0 0
    %1783 = vmatpush1.bf16.msra.mxu0 %v1725
    %1784 = vmatprep.subr.bf16.mxu0 0
    %1785 = vmatpush1.bf16.msra.mxu0 %v1726
    %1786 = vmatprep.subr.bf16.mxu0 0
    %1787 = vmatpush1.bf16.msra.mxu0 %v1727
    %1788 = vmatprep.subr.bf16.mxu0 0
    %1789 = vmatpush1.bf16.msra.mxu0 %v1728
    %1790 = vmatprep.subr.bf16.mxu0 0
    %1791 = vmatpush1.bf16.msra.mxu0 %v1729
    %1792 = vmatprep.subr.bf16.mxu0 0
    %1793 = vmatpush1.bf16.msra.mxu0 %v1730
    %1794 = vmatprep.subr.bf16.mxu0 0
    %1795 = vmatpush1.bf16.msra.mxu0 %v1731
    %1796 = vmatprep.mubr.bf16.mxu0 %v1563
    %1797 = vmatmul.mubr.bf16.gmra.mrb[0].mxu0 %v1562
    %v1798 = vpop.f32.mrb[0].mxu0
    %v1799 = vadd.f32 %v1618, %v1798
    %v1800 = vpop.f32.mrb[0].mxu0
    %v1801 = vpop.f32.mrb[0].mxu0
    %v1802 = vpop.f32.mrb[0].mxu0
    %1803 = vdwg.mxu0
    %1804 = vmatprep.subr.bf16.mxu0 0
    %1805 = vmatpush1.bf16.msra.mxu0 %v1732
    %1806 = vmatprep.subr.bf16.mxu0 0
    %1807 = vmatpush1.bf16.msra.mxu0 %v1733
    %1808 = vmatprep.subr.bf16.mxu0 0
    %1809 = vmatpush1.bf16.msra.mxu0 %v1734
    %1810 = vmatprep.subr.bf16.mxu0 0
    %1811 = vmatpush1.bf16.msra.mxu0 %v1735
    %1812 = vmatprep.subr.bf16.mxu0 0
    %1813 = vmatpush1.bf16.msra.mxu0 %v1736
    %1814 = vmatprep.subr.bf16.mxu0 0
    %1815 = vmatpush1.bf16.msra.mxu0 %v1737
    %1816 = vmatprep.subr.bf16.mxu0 0
    %1817 = vmatpush1.bf16.msra.mxu0 %v1738
    %1818 = vmatprep.subr.bf16.mxu0 0
    %1819 = vmatpush1.bf16.msra.mxu0 %v1739
    %1820 = vmatprep.subr.bf16.mxu0 0
    %1821 = vmatpush1.bf16.msra.mxu0 0
    %1822 = vmatprep.subr.bf16.mxu0 0
    %1823 = vmatpush1.bf16.msra.mxu0 0
    %1824 = vmatprep.subr.bf16.mxu0 0
    %1825 = vmatpush1.bf16.msra.mxu0 0
    %1826 = vmatprep.subr.bf16.mxu0 0
    %1827 = vmatpush1.bf16.msra.mxu0 0
    %1828 = vmatprep.subr.bf16.mxu0 0
    %1829 = vmatpush1.bf16.msra.mxu0 0
    %1830 = vmatprep.subr.bf16.mxu0 0
    %1831 = vmatpush1.bf16.msra.mxu0 0
    %1832 = vmatprep.subr.bf16.mxu0 0
    %1833 = vmatpush1.bf16.msra.mxu0 0
    %1834 = vmatprep.subr.bf16.mxu0 0
    %1835 = vmatpush1.bf16.msra.mxu0 0
    %1836 = vmatprep.mubr.bf16.mxu0 0
    %1837 = vmatmul.mubr.bf16.gmra.mrb[0].mxu0 %v1564
    %v1838 = vpop.f32.mrb[0].mxu0
    %v1839 = vadd.f32 %v1799, %v1838
    %v1840 = vpop.f32.mrb[0].mxu0
    %v1841 = vpop.f32.mrb[0].mxu0
    %v1842 = vpop.f32.mrb[0].mxu0
    %1843 = vdwg.mxu0
    %v1844 = vmax.f32 %v1839, 0.0
    %v1845 = vpack.c.bf16 %v1844, %v1844
    %v1846 = vld [vmem:[#allocation8] sm:$0xff]
    %v1847 = vld [vmem:[#allocation8 + $0x8] sm:$0xff]
    %v1848 = vld [vmem:[#allocation8 + $0x10] sm:$0xff]
    %v1849 = vld [vmem:[#allocation8 + $0x18] sm:$0xff]
    %v1850 = vld [vmem:[#allocation8 + $0x20] sm:$0xff]
    %v1851 = vld [vmem:[#allocation8 + $0x28] sm:$0xff]
    %v1852 = vld [vmem:[#allocation8 + $0x30] sm:$0xff]
    %v1853 = vld [vmem:[#allocation8 + $0x38] sm:$0xff]
    %v1854 = vld [vmem:[#allocation8 + $0x40] sm:$0xff]
    %v1855 = vld [vmem:[#allocation8 + $0x48] sm:$0xff]
    %v1856 = vld [vmem:[#allocation8 + $0x50] sm:$0xff]
    %v1857 = vld [vmem:[#allocation8 + $0x58] sm:$0xff]
    %v1858 = vld [vmem:[#allocation8 + $0x60] sm:$0xff]
    %v1859 = vld [vmem:[#allocation8 + $0x68] sm:$0xff]
    %v1860 = vld [vmem:[#allocation8 + $0x70] sm:$0xff]
    %v1861 = vld [vmem:[#allocation8 + $0x78] sm:$0xff]
    %v1862 = vld [vmem:[%s6] sm:$0x3]
    %v1864 = vlaneseq
    %v1865 = vshrl.u32 %v1864, 7
    %v1866 = vsub.s32 0, %v1865
    %v1867 = vrot.slane %v1862, %v1866
    %v1868 = vlaneseq
    %v1869 = vshrl.u32 %v1868, 7
    %v1870 = vsub.s32 1, %v1869
    %v1871 = vrot.slane %v1862, %v1870
    %v1890 = vunpack.c.l.b16 %v1846
    %v1891 = vunpack.c.h.b16 %v1846
    %v1892 = vunpack.c.l.b16 %v1847
    %v1893 = vunpack.c.h.b16 %v1847
    %v1894 = vunpack.c.l.b16 %v1848
    %v1895 = vunpack.c.h.b16 %v1848
    %v1896 = vunpack.c.l.b16 %v1849
    %v1897 = vunpack.c.h.b16 %v1849
    %v1898 = vunpack.c.l.b16 %v1850
    %v1899 = vunpack.c.h.b16 %v1850
    %v1900 = vunpack.c.l.b16 %v1851
    %v1901 = vunpack.c.h.b16 %v1851
    %v1902 = vunpack.c.l.b16 %v1852
    %v1903 = vunpack.c.h.b16 %v1852
    %v1904 = vunpack.c.l.b16 %v1853
    %v1905 = vunpack.c.h.b16 %v1853
    %v1906 = vunpack.c.l.b16 %v1854
    %v1907 = vunpack.c.h.b16 %v1854
    %v1908 = vunpack.c.l.b16 %v1855
    %v1909 = vunpack.c.h.b16 %v1855
    %v1910 = vunpack.c.l.b16 %v1856
    %v1911 = vunpack.c.h.b16 %v1856
    %v1912 = vunpack.c.l.b16 %v1857
    %v1913 = vunpack.c.h.b16 %v1857
    %v1914 = vunpack.c.l.b16 %v1858
    %v1915 = vunpack.c.h.b16 %v1858
    %v1916 = vunpack.c.l.b16 %v1859
    %v1917 = vunpack.c.h.b16 %v1859
    %v1918 = vunpack.c.l.b16 %v1860
    %v1919 = vunpack.c.h.b16 %v1860
    %v1920 = vunpack.c.l.b16 %v1861
    %v1921 = vunpack.c.h.b16 %v1861
    %v1922 = vpack.c.b16 %v1892, %v1890
    %v1923 = vpack.c.b16 %v1893, %v1891
    %v1924 = vpack.c.b16 %v1896, %v1894
    %v1925 = vpack.c.b16 %v1897, %v1895
    %v1926 = vpack.c.b16 %v1900, %v1898
    %v1927 = vpack.c.b16 %v1901, %v1899
    %v1928 = vpack.c.b16 %v1904, %v1902
    %v1929 = vpack.c.b16 %v1905, %v1903
    %v1930 = vpack.c.b16 %v1908, %v1906
    %v1931 = vpack.c.b16 %v1909, %v1907
    %v1932 = vpack.c.b16 %v1912, %v1910
    %v1933 = vpack.c.b16 %v1913, %v1911
    %v1934 = vpack.c.b16 %v1916, %v1914
    %v1935 = vpack.c.b16 %v1917, %v1915
    %v1936 = vpack.c.b16 %v1920, %v1918
    %v1937 = vpack.c.b16 %v1921, %v1919
    %1954 = vmatprep.subr.bf16.mxu0 %v1923
    %1955 = vmatpush1.bf16.msra.mxu0 %v1922
    %1956 = vmatprep.subr.bf16.mxu0 %v1925
    %1957 = vmatpush1.bf16.msra.mxu0 %v1924
    %1958 = vmatprep.subr.bf16.mxu0 %v1927
    %1959 = vmatpush1.bf16.msra.mxu0 %v1926
    %1960 = vmatprep.subr.bf16.mxu0 %v1929
    %1961 = vmatpush1.bf16.msra.mxu0 %v1928
    %1962 = vmatprep.subr.bf16.mxu0 %v1931
    %1963 = vmatpush1.bf16.msra.mxu0 %v1930
    %1964 = vmatprep.subr.bf16.mxu0 %v1933
    %1965 = vmatpush1.bf16.msra.mxu0 %v1932
    %1966 = vmatprep.subr.bf16.mxu0 %v1935
    %1967 = vmatpush1.bf16.msra.mxu0 %v1934
    %1968 = vmatprep.subr.bf16.mxu0 %v1937
    %1969 = vmatpush1.bf16.msra.mxu0 %v1936
    %1970 = vmatprep.subr.bf16.mxu0 0
    %1971 = vmatpush1.bf16.msra.mxu0 0
    %1972 = vmatprep.subr.bf16.mxu0 0
    %1973 = vmatpush1.bf16.msra.mxu0 0
    %1974 = vmatprep.subr.bf16.mxu0 0
    %1975 = vmatpush1.bf16.msra.mxu0 0
    %1976 = vmatprep.subr.bf16.mxu0 0
    %1977 = vmatpush1.bf16.msra.mxu0 0
    %1978 = vmatprep.subr.bf16.mxu0 0
    %1979 = vmatpush1.bf16.msra.mxu0 0
    %1980 = vmatprep.subr.bf16.mxu0 0
    %1981 = vmatpush1.bf16.msra.mxu0 0
    %1982 = vmatprep.subr.bf16.mxu0 0
    %1983 = vmatpush1.bf16.msra.mxu0 0
    %1984 = vmatprep.subr.bf16.mxu0 0
    %1985 = vmatpush1.bf16.msra.mxu0 0
    %1986 = vmatprep.mubr.bf16.mxu0 0
    %1987 = vmatmul.mubr.bf16.gmra.mrb[0].mxu0 %v1845
    %v1988 = vpop.f32.mrb[0].mxu0
    %v1989 = vadd.f32 %v1867, %v1988
    %v1990 = vpop.f32.mrb[0].mxu0
    %v1991 = vadd.f32 %v1871, %v1990
    %v1992 = vpop.f32.mrb[0].mxu0
    %v1993 = vpop.f32.mrb[0].mxu0
    %1994 = vdwg.mxu0
    %v1995 = vmul.f32 %v1991, 0.5
    %v1996 = vmul.f32 %v1995, 1.442695
    %v1997 = vpow.pop %v1996
    %v1998 = vld [vmem:[%s7] sm:$0xff]
    %v1999 = vmul.f32 %v1997, %v1998
    %v2000 = vadd.f32 %v1989, %v1999
    %2001 = vst [vmem:[#allocation10] sm:$0xff] %v2000
    %2002 = vst [vmem:[#allocation10 + $0x8] sm:$0xff] %v1989
    %2003 = vst [vmem:[#allocation10 + $0x10] sm:$0xff] %v1991
    // Predicated region
    $region50: #{tpu_custom_call.1} parent=1 // pred_check
      _
    $region51: #{tpu_custom_call.1} parent=1 // pred_check_branch
      %2005 = sbr.rel (0) target = $region53
    $region52: #{tpu_custom_call.1} parent=1 // pred_region
      %s2007 = ssub.s32 384, 384
      %2008 = vsyncadd [#allocation4], %s2007
      %s2010 = sshll.u32 [#allocation10], 4
      %s2011 = int_to_ptr.vmem [resolvable:$true] %s2010
      %2013 = dma.vmem_to_hbm [thread:$0]  %s2011, 384, %s8, [#allocation4]
    $region53: #{tpu_custom_call.1} parent=1 // pred_fallthru
      _
    // Predicated region
    $region54: #{tpu_custom_call.1} parent=1 // pred_check
      _
    $region55: #{tpu_custom_call.1} parent=1 // pred_check_branch
      %2015 = sbr.rel (0) target = $region57
    $region56: #{tpu_custom_call.1} parent=1 // pred_region
      %2016 = dma.done [#allocation4], 384
    $region57: #{tpu_custom_call.1} parent=1 // pred_fallthru
      _
    %2017 = vsyncpa [#allocation3], 1
    %2018 = vsyncpa [#allocation6], 1
    %2019 = vsyncpa [#allocation9], 1
    %2020 = vsyncpa [#allocation4], 1

</llo_original>
